<compile_context>
chip_gen: v6e
topology: v6e:2x2x1
jax: 0.10.0
libtpu: 0.0.40
codegen_flags: <defaults>
</compile_context>

<pallas_src>
import functools
import math

import jax
import jax.numpy as jnp
from jax.experimental import pallas as pl
from jax.experimental.pallas import tpu as pltpu

# TODO(synk): PyTorch reads glb_var 'mask_to_value'; a large finite negative is
# used here (it must stay finite so fully-masked rows stay NaN-free).
MASK_VALUE = -1e9


def _fit_tile(n, pref, align):
    """Largest tile t <= pref with t % align == 0 and n % t == 0; otherwise the
    full dim n (a full-extent block is always layout-legal)."""
    if n <= pref:
        return n
    t = (pref // align) * align
    while t >= align:
        if n % t == 0:
            return t
        t -= align
    return n


# --------------------------------------------------------------------------
# Linear kernels — tiled MXU matmul, bf16 inputs, f32 accumulation.
# Grid = (G, M/tm, N/tn, K/tk); K is the innermost (arbitrary) reduction axis.
# --------------------------------------------------------------------------
def _linear_kernel(x_ref, w_ref, o_ref, acc_ref):
    k = pl.program_id(3)

    @pl.when(k == 0)
    def _init():
        acc_ref[...] = jnp.zeros(acc_ref.shape, jnp.float32)

    acc_ref[...] += jnp.dot(x_ref[...].astype(jnp.bfloat16),
                            w_ref[...].astype(jnp.bfloat16),
                            preferred_element_type=jnp.float32)

    @pl.when(k == pl.num_programs(3) - 1)
    def _store():
        o_ref[...] = acc_ref[...].astype(o_ref.dtype)


def _linear_bias_kernel(x_ref, w_ref, b_ref, o_ref, acc_ref):
    k = pl.program_id(3)

    @pl.when(k == 0)
    def _init():
        acc_ref[...] = jnp.broadcast_to(b_ref[...].astype(jnp.float32),
                                        acc_ref.shape)

    acc_ref[...] += jnp.dot(x_ref[...].astype(jnp.bfloat16),
                            w_ref[...].astype(jnp.bfloat16),
                            preferred_element_type=jnp.float32)

    @pl.when(k == pl.num_programs(3) - 1)
    def _store():
        o_ref[...] = acc_ref[...].astype(o_ref.dtype)


def pallas_linear(x, w, b=None, *, tm=256, tn=256, tk=512):
    """out = x @ w (+ b).  x: (M, K) or (G, M, K); w: (K, N) or (G, K, N)."""
    squeeze = x.ndim == 2
    if squeeze:
        x, w = x[None], w[None]
        if b is not None:
            b = b[None]
    G, M, K = x.shape
    Gw, K2, N = w.shape
    assert Gw == G and K2 == K

    tm = _fit_tile(M, tm, 8)
    tn = _fit_tile(N, tn, 128)
    tk = _fit_tile(K, tk, 128)
    grid = (G, M // tm, N // tn, K // tk)

    in_specs = [
        pl.BlockSpec((None, tm, tk), lambda g, i, j, k: (g, i, k)),
        pl.BlockSpec((None, tk, tn), lambda g, i, j, k: (g, k, j)),
    ]
    args = [x, w]
    if b is None:
        kernel = _linear_kernel      # no fabricated zero-bias stream
    else:
        kernel = _linear_bias_kernel
        in_specs.append(
            pl.BlockSpec((None, 1, tn), lambda g, i, j, k: (g, 0, j)))
        args.append(b.reshape(G, 1, N))

    out = pl.pallas_call(
        kernel,
        out_shape=jax.ShapeDtypeStruct((G, M, N), x.dtype),
        grid_spec=pltpu.PrefetchScalarGridSpec(
            num_scalar_prefetch=0,
            grid=grid,
            in_specs=in_specs,
            out_specs=pl.BlockSpec((None, tm, tn), lambda g, i, j, k: (g, i, j)),
            scratch_shapes=[pltpu.VMEM((tm, tn), jnp.float32)],
        ),
        compiler_params=pltpu.CompilerParams(
            dimension_semantics=("parallel", "parallel", "parallel",
                                 "arbitrary")),
    )(*args)
    return out[0] if squeeze else out


# --------------------------------------------------------------------------
# Fused attention kernel: all heads per grid step, online softmax along the
# kv axis, bf16 MXU matmuls, lane-dense merged-head output.
# Grid = (B, Lq/tq, Lk/tk); kv axis innermost ("arbitrary").
# --------------------------------------------------------------------------
def _mha_attn_kernel(q_ref, k_ref, v_ref, mask_ref, o_ref,
                     qs_sc, m_sc, l_sc, acc_sc, *,
                     n_heads, d_qk, d_v, scale, mask_value):
    ki = pl.program_id(2)

    @pl.when(ki == 0)
    def _init():
        # Fold 1/sqrt(temperature) into q once per q-tile; cache as bf16
        # (q is resident across the whole kv axis).
        qs_sc[...] = (q_ref[...] * scale).astype(jnp.bfloat16)
        m_sc[...] = jnp.full(m_sc.shape, -jnp.inf, jnp.float32)
        l_sc[...] = jnp.zeros(l_sc.shape, jnp.float32)
        acc_sc[...] = jnp.zeros(acc_sc.shape, jnp.float32)

    k_all = k_ref[...].astype(jnp.bfloat16)          # (tk, H*d_qk)
    v_all = v_ref[...].astype(jnp.bfloat16)          # (tk, H*d_v)
    masked = mask_ref[...] != 0                      # (tq, tk); nonzero == masked

    # Heads are unrolled statically: each head is a contiguous lane slice of
    # the (tq, H*Dh) blocks, so Q/K/V stay in the projection layout (no HBM
    # transposes) and the int8 mask tile is shared by every head in this step.
    # TODO(synk): for very large n_heads*Dh, chunk heads across an extra grid
    # axis instead of unrolling them all in one step.
    for h in range(n_heads):
        q_h = qs_sc[:, h * d_qk:(h + 1) * d_qk]                     # (tq, d_qk)
        k_h = k_all[:, h * d_qk:(h + 1) * d_qk]                     # (tk, d_qk)
        s = jax.lax.dot_general(q_h, k_h, (((1,), (1,)), ((), ())),
                                preferred_element_type=jnp.float32)  # (tq, tk)
        s = jnp.where(masked, mask_value, s)

        m_prev = m_sc[:, h:h + 1]                                    # (tq, 1)
        m_new = jnp.maximum(m_prev, s.max(axis=-1, keepdims=True))
        alpha = jnp.exp(m_prev - m_new)
        p = jnp.exp(s - m_new)                                       # (tq, tk)

        l_sc[:, h:h + 1] = alpha * l_sc[:, h:h + 1] + p.sum(axis=-1,
                                                            keepdims=True)
        v_h = v_all[:, h * d_v:(h + 1) * d_v]                        # (tk, d_v)
        pv = jax.lax.dot_general(p.astype(jnp.bfloat16), v_h,
                                 (((1,), (0,)), ((), ())),
                                 preferred_element_type=jnp.float32)  # (tq, d_v)
        acc_sc[:, h * d_v:(h + 1) * d_v] = (
            alpha * acc_sc[:, h * d_v:(h + 1) * d_v] + pv)
        m_sc[:, h:h + 1] = m_new

    @pl.when(ki == pl.num_programs(2) - 1)
    def _store():
        inv_l = pl.reciprocal(l_sc[...], approx=True)                # (tq, H)
        merged = jnp.concatenate(
            [acc_sc[:, h * d_v:(h + 1) * d_v] * inv_l[:, h:h + 1]
             for h in range(n_heads)], axis=-1)                      # (tq, H*d_v)
        o_ref[...] = merged.astype(o_ref.dtype)


def flash_attention(Q, K, V, mask, *, n_heads, scale, mask_value=MASK_VALUE,
                    tq=256, tk=512):
    """Q: (B, Lq, H*d_qk), K: (B, Lk, H*d_qk), V: (B, Lk, H*d_v),
    mask: (B, Lq, Lk) int8 (nonzero == masked).
    Returns (B, Lq, H*d_v) with heads already merged (ready for W_O)."""
    B, Lq, hdq = Q.shape
    _, Lk, hdk = K.shape
    _, Lkv, hdv = V.shape
    assert hdq == hdk and Lk == Lkv
    d_qk = hdq // n_heads
    d_v = hdv // n_heads

    tq = _fit_tile(Lq, tq, 8)
    tk = _fit_tile(Lk, tk, 128)
    grid = (B, Lq // tq, Lk // tk)

    kernel = functools.partial(_mha_attn_kernel, n_heads=n_heads, d_qk=d_qk,
                               d_v=d_v, scale=scale, mask_value=mask_value)
    return pl.pallas_call(
        kernel,
        out_shape=jax.ShapeDtypeStruct((B, Lq, hdv), Q.dtype),
        grid_spec=pltpu.PrefetchScalarGridSpec(
            num_scalar_prefetch=0,
            grid=grid,
            in_specs=[
                pl.BlockSpec((None, tq, hdq), lambda b, qi, ki: (b, qi, 0)),
                pl.BlockSpec((None, tk, hdk), lambda b, qi, ki: (b, ki, 0)),
                pl.BlockSpec((None, tk, hdv), lambda b, qi, ki: (b, ki, 0)),
                # int8 mask shared by all heads; indexed only by (b, q, kv).
                pl.BlockSpec((None, tq, tk), lambda b, qi, ki: (b, qi, ki)),
            ],
            out_specs=pl.BlockSpec((None, tq, hdv),
                                   lambda b, qi, ki: (b, qi, 0)),
            scratch_shapes=[
                pltpu.VMEM((tq, hdq), jnp.bfloat16),     # pre-scaled q
                pltpu.VMEM((tq, n_heads), jnp.float32),  # running max / head
                pltpu.VMEM((tq, n_heads), jnp.float32),  # running denom / head
                pltpu.VMEM((tq, hdv), jnp.float32),      # running numerator
            ],
        ),
        compiler_params=pltpu.CompilerParams(
            dimension_semantics=("parallel", "parallel", "arbitrary"),
            # Raised scoped VMEM for large tiles; still < v7x's 64 MiB physical.
            vmem_limit_bytes=32 * 1024 * 1024),
    )(Q, K, V, mask)


# --------------------------------------------------------------------------
# Full MultiHeadAttention forward.
# --------------------------------------------------------------------------
@functools.partial(
    jax.jit, static_argnames=("n_heads", "d_q", "d_k", "d_v", "mask_value"))
def multi_head_attention(input_Q, input_K, input_V, mask,
                         W_Q, W_K, W_V, W_O, b_O, *,
                         n_heads, d_q, d_k, d_v, mask_value=MASK_VALUE):
    B, Lq, d = input_Q.shape
    Lk = input_K.shape[1]
    Lv = input_V.shape[1]

    # Bias-free Q/K/V projections.  When the three GEMMs share a shape, run
    # them as ONE stacked pallas_call (leading grid axis of 3) instead of
    # three separate launches.
    if (d_q == d_k == d_v and Lq == Lk == Lv
            and input_K.shape[2] == d and input_V.shape[2] == d):
        x3 = jnp.stack([input_Q.reshape(B * Lq, d),
                        input_K.reshape(B * Lk, d),
                        input_V.reshape(B * Lv, d)])
        w3 = jnp.stack([W_Q, W_K, W_V])
        qkv = pallas_linear(x3, w3)                      # (3, B*L, H*Dh)
        Q, K, V = qkv[0], qkv[1], qkv[2]
    else:
        Q = pallas_linear(input_Q.reshape(B * Lq, d), W_Q)
        K = pallas_linear(input_K.reshape(B * Lk, d), W_K)
        V = pallas_linear(input_V.reshape(B * Lv, d), W_V)

    # Keep the projection layout (B, L, H*Dh): the attention kernel consumes
    # it directly, so no reshape(...).transpose HBM round trips are needed.
    Q = Q.reshape(B, Lq, n_heads * d_q)
    K = K.reshape(B, Lk, n_heads * d_k)
    V = V.reshape(B, Lv, n_heads * d_v)

    # temperature = d_k / n_heads (per the module); folded into q in-kernel.
    scale = 1.0 / math.sqrt(d_k / n_heads)
    att = flash_attention(Q, K, V, mask.astype(jnp.int8), n_heads=n_heads,
                          scale=scale, mask_value=mask_value)

    # att already has heads merged: (B, Lq, H*Dv) -> output projection (+bias).
    out = pallas_linear(att.reshape(B * Lq, n_heads * d_v), W_O, b_O)
    return out.reshape(B, Lq, d)


# --------------------------------------------------------------------------
# Pure-JAX f32 reference matching the PyTorch forward.
# --------------------------------------------------------------------------
def reference_mha(input_Q, input_K, input_V, mask,
                  W_Q, W_K, W_V, W_O, b_O, *,
                  n_heads, d_q, d_k, d_v, mask_value=MASK_VALUE):
    B, Lq, d = input_Q.shape
    Lk = input_K.shape[1]
    Q = (input_Q @ W_Q).reshape(B, Lq, n_heads, d_q).transpose(0, 2, 1, 3)
    K = (input_K @ W_K).reshape(B, Lk, n_heads, d_k).transpose(0, 2, 1, 3)
    V = (input_V @ W_V).reshape(B, Lk, n_heads, d_v).transpose(0, 2, 1, 3)
    scale = 1.0 / math.sqrt(d_k / n_heads)
    scores = jnp.einsum("bhqd,bhkd->bhqk", Q, K) * scale
    scores = jnp.where(mask[:, None, :, :], mask_value, scores)
    attn = jax.nn.softmax(scores, axis=-1)
    att = jnp.einsum("bhqk,bhkd->bhqd", attn, V)
    att = att.transpose(0, 2, 1, 3).reshape(B * Lq, n_heads * d_v)
    return (att @ W_O + b_O).reshape(B, Lq, d)


if __name__ == "__main__":
    key = jax.random.PRNGKey(0)
    kq, kk, kv, km, kwq, kwk, kwv, kwo, kbo = jax.random.split(key, 9)

    # Small deterministic shapes consistent with the module.
    B, L, d = 2, 8, 32
    n_heads, d_q, d_k, d_v = 4, 8, 8, 8

    input_Q = jax.random.normal(kq, (B, L, d), dtype=jnp.float32)
    input_K = jax.random.normal(kk, (B, L, d), dtype=jnp.float32)
    input_V = jax.random.normal(kv, (B, L, d), dtype=jnp.float32)
    mask = jax.random.bernoulli(km, 0.25, (B, L, L))  # True = masked out

    s = 1.0 / math.sqrt(d)
    W_Q = jax.random.normal(kwq, (d, n_heads * d_q), dtype=jnp.float32) * s
    W_K = jax.random.normal(kwk, (d, n_heads * d_k), dtype=jnp.float32) * s
    W_V = jax.random.normal(kwv, (d, n_heads * d_v), dtype=jnp.float32) * s
    W_O = jax.random.normal(kwo, (n_heads * d_v, d), dtype=jnp.float32) * s
    b_O = jax.random.normal(kbo, (d,), dtype=jnp.float32) * 0.1

    out = multi_head_attention(input_Q, input_K, input_V, mask,
                               W_Q, W_K, W_V, W_O, b_O,
                               n_heads=n_heads, d_q=d_q, d_k=d_k, d_v=d_v)
    out = jax.block_until_ready(out)

    ref = reference_mha(input_Q, input_K, input_V, mask,
                        W_Q, W_K, W_V, W_O, b_O,
                        n_heads=n_heads, d_q=d_q, d_k=d_k, d_v=d_v)

    assert out.shape == (B, L, d), out.shape
    assert out.dtype == jnp.float32, out.dtype
    # Tolerance accounts for bf16 MXU inputs (f32 accumulation) and the
    # approximate EUP reciprocal in the softmax epilogue.
    assert jnp.allclose(out, ref, atol=5e-2, rtol=5e-2), (
        "Pallas output mismatch vs reference; max abs err = "
        f"{float(jnp.max(jnp.abs(out - ref)))}")

    print("KERNEL_OK")
</pallas_src>

<mosaic_0001>
module attributes {stable_mosaic.version = 11 : i64} {
  func.func @_linear_kernel(%arg0: i32, %arg1: i32, %arg2: i32, %arg3: i32, %arg4: memref<1x16x32xf32, #tpu.memory_space<vmem>>, %arg5: memref<1x32x32xf32, #tpu.memory_space<vmem>>, %arg6: memref<1x16x32xf32, #tpu.memory_space<vmem>>, %arg7: memref<16x32xf32, #tpu.memory_space<vmem>>) attributes {dimension_semantics = [#tpu.dimension_semantics<parallel>, #tpu.dimension_semantics<parallel>, #tpu.dimension_semantics<parallel>, #tpu.dimension_semantics<arbitrary>], iteration_bounds = array<i64: 3, 1, 1, 1>, scalar_prefetch = 0 : i64, scratch_operands = 1 : i64, tpu.core_type = #tpu.core_type<tc>, window_params = [{transform_indices = @transform_0, window_bounds = array<i64: 1, 16, 32>}, {transform_indices = @transform_1, window_bounds = array<i64: 1, 32, 32>}, {transform_indices = @transform_2, window_bounds = array<i64: 1, 16, 32>}]} {
    %c0_i32 = arith.constant 0 : i32
    %0 = arith.cmpi eq, %arg3, %c0_i32 : i32
    %1 = arith.extui %0 : i1 to i32
    %c0_i32_0 = arith.constant 0 : i32
    %2 = arith.cmpi ne, %1, %c0_i32_0 : i32
    scf.if %2 {
      %cst_12 = arith.constant 0.000000e+00 : f32
      %16 = vector.broadcast %cst_12 : f32 to vector<16x32xf32>
      %c0_13 = arith.constant 0 : index
      %c0_14 = arith.constant 0 : index
      %17 = vector.load %arg7[%c0_13, %c0_14] : memref<16x32xf32, #tpu.memory_space<vmem>>, vector<16x32xf32>
      tpu.vector_store %arg7[%c0_13, %c0_14], %16 {strides = array<i32>} : memref<16x32xf32, #tpu.memory_space<vmem>>, vector<16x32xf32>,
    } else {
    }
    %c0 = arith.constant 0 : index
    %c0_1 = arith.constant 0 : index
    %3 = vector.load %arg7[%c0, %c0_1] : memref<16x32xf32, #tpu.memory_space<vmem>>, vector<16x32xf32>
    %c0_2 = arith.constant 0 : index
    %c0_3 = arith.constant 0 : index
    %c0_4 = arith.constant 0 : index
    %4 = vector.load %arg4[%c0_2, %c0_3, %c0_4] : memref<1x16x32xf32, #tpu.memory_space<vmem>>, vector<1x16x32xf32>
    %5 = vector.shape_cast %4 : vector<1x16x32xf32> to vector<16x32xf32>
    %6 = arith.truncf %5 : vector<16x32xf32> to vector<16x32xbf16>
    %c0_5 = arith.constant 0 : index
    %c0_6 = arith.constant 0 : index
    %c0_7 = arith.constant 0 : index
    %7 = vector.load %arg5[%c0_5, %c0_6, %c0_7] : memref<1x32x32xf32, #tpu.memory_space<vmem>>, vector<1x32x32xf32>
    %8 = vector.shape_cast %7 : vector<1x32x32xf32> to vector<32x32xf32>
    %9 = arith.truncf %8 : vector<32x32xf32> to vector<32x32xbf16>
    %cst = arith.constant dense<0.000000e+00> : vector<16x32xf32>
    %10 = tpu.matmul %6, %9, %cst {dimension_numbers = #tpu.dot_dimension_numbers<[1], [0], [0], [1], [0, 0, 1, 1], [], []>} : vector<16x32xbf16>, vector<32x32xbf16>, vector<16x32xf32> -> vector<16x32xf32>
    %11 = arith.addf %3, %10 : vector<16x32xf32>
    %c0_8 = arith.constant 0 : index
    %c0_9 = arith.constant 0 : index
    %12 = vector.load %arg7[%c0_8, %c0_9] : memref<16x32xf32, #tpu.memory_space<vmem>>, vector<16x32xf32>
    tpu.vector_store %arg7[%c0_8, %c0_9], %11 {strides = array<i32>} : memref<16x32xf32, #tpu.memory_space<vmem>>, vector<16x32xf32>,
    %c0_i32_10 = arith.constant 0 : i32
    %13 = arith.cmpi eq, %arg3, %c0_i32_10 : i32
    %14 = arith.extui %13 : i1 to i32
    %c0_i32_11 = arith.constant 0 : i32
    %15 = arith.cmpi ne, %14, %c0_i32_11 : i32
    scf.if %15 {
      %c0_12 = arith.constant 0 : index
      %c0_13 = arith.constant 0 : index
      %16 = vector.load %arg7[%c0_12, %c0_13] : memref<16x32xf32, #tpu.memory_space<vmem>>, vector<16x32xf32>
      %c0_14 = arith.constant 0 : index
      %c0_15 = arith.constant 0 : index
      %c0_16 = arith.constant 0 : index
      %17 = vector.load %arg6[%c0_14, %c0_15, %c0_16] : memref<1x16x32xf32, #tpu.memory_space<vmem>>, vector<1x16x32xf32>
      %18 = vector.shape_cast %17 : vector<1x16x32xf32> to vector<16x32xf32>
      %19 = vector.shape_cast %16 : vector<16x32xf32> to vector<1x16x32xf32>
      tpu.vector_store %arg6[%c0_14, %c0_15, %c0_16], %19 {strides = array<i32>} : memref<1x16x32xf32, #tpu.memory_space<vmem>>, vector<1x16x32xf32>,
    } else {
    }
    return
  }
  func.func @transform_0(%arg0: i32, %arg1: i32, %arg2: i32, %arg3: i32) -> (i32, i32, i32) {
    %c0_i32 = arith.constant 0 : i32
    return %arg0, %arg1, %arg3 : i32, i32, i32
  }
  func.func @transform_1(%arg0: i32, %arg1: i32, %arg2: i32, %arg3: i32) -> (i32, i32, i32) {
    %c0_i32 = arith.constant 0 : i32
    return %arg0, %arg3, %arg2 : i32, i32, i32
  }
  func.func @transform_2(%arg0: i32, %arg1: i32, %arg2: i32, %arg3: i32) -> (i32, i32, i32) {
    %c0_i32 = arith.constant 0 : i32
    return %arg0, %arg1, %arg2 : i32, i32, i32
  }
}

module attributes {stable_mosaic.version = 11 : i64} {
  func.func @_linear_bias_kernel(%arg0: i32, %arg1: i32, %arg2: i32, %arg3: i32, %arg4: memref<1x16x32xf32, #tpu.memory_space<vmem>>, %arg5: memref<1x32x32xf32, #tpu.memory_space<vmem>>, %arg6: memref<1x1x32xf32, #tpu.memory_space<vmem>>, %arg7: memref<1x16x32xf32, #tpu.memory_space<vmem>>, %arg8: memref<16x32xf32, #tpu.memory_space<vmem>>) attributes {dimension_semantics = [#tpu.dimension_semantics<parallel>, #tpu.dimension_semantics<parallel>, #tpu.dimension_semantics<parallel>, #tpu.dimension_semantics<arbitrary>], iteration_bounds = array<i64: 1, 1, 1, 1>, scalar_prefetch = 0 : i64, scratch_operands = 1 : i64, tpu.core_type = #tpu.core_type<tc>, window_params = [{transform_indices = @transform_0, window_bounds = array<i64: 1, 16, 32>}, {transform_indices = @transform_1, window_bounds = array<i64: 1, 32, 32>}, {transform_indices = @transform_2, window_bounds = array<i64: 1, 1, 32>}, {transform_indices = @transform_3, window_bounds = array<i64: 1, 16, 32>}]} {
    %c0_i32 = arith.constant 0 : i32
    %0 = arith.cmpi eq, %arg3, %c0_i32 : i32
    %1 = arith.extui %0 : i1 to i32
    %c0_i32_0 = arith.constant 0 : i32
    %2 = arith.cmpi ne, %1, %c0_i32_0 : i32
    scf.if %2 {
      %c0_12 = arith.constant 0 : index
      %c0_13 = arith.constant 0 : index
      %c0_14 = arith.constant 0 : index
      %16 = vector.load %arg6[%c0_12, %c0_13, %c0_14] : memref<1x1x32xf32, #tpu.memory_space<vmem>>, vector<1x1x32xf32>
      %17 = vector.shape_cast %16 : vector<1x1x32xf32> to vector<1x32xf32>
      %18 = vector.shape_cast %17 : vector<1x32xf32> to vector<1x32xf32>
      %19 = vector.broadcast %18 : vector<1x32xf32> to vector<16x32xf32>
      %c0_15 = arith.constant 0 : index
      %c0_16 = arith.constant 0 : index
      %20 = vector.load %arg8[%c0_15, %c0_16] : memref<16x32xf32, #tpu.memory_space<vmem>>, vector<16x32xf32>
      tpu.vector_store %arg8[%c0_15, %c0_16], %19 {strides = array<i32>} : memref<16x32xf32, #tpu.memory_space<vmem>>, vector<16x32xf32>,
    } else {
    }
    %c0 = arith.constant 0 : index
    %c0_1 = arith.constant 0 : index
    %3 = vector.load %arg8[%c0, %c0_1] : memref<16x32xf32, #tpu.memory_space<vmem>>, vector<16x32xf32>
    %c0_2 = arith.constant 0 : index
    %c0_3 = arith.constant 0 : index
    %c0_4 = arith.constant 0 : index
    %4 = vector.load %arg4[%c0_2, %c0_3, %c0_4] : memref<1x16x32xf32, #tpu.memory_space<vmem>>, vector<1x16x32xf32>
    %5 = vector.shape_cast %4 : vector<1x16x32xf32> to vector<16x32xf32>
    %6 = arith.truncf %5 : vector<16x32xf32> to vector<16x32xbf16>
    %c0_5 = arith.constant 0 : index
    %c0_6 = arith.constant 0 : index
    %c0_7 = arith.constant 0 : index
    %7 = vector.load %arg5[%c0_5, %c0_6, %c0_7] : memref<1x32x32xf32, #tpu.memory_space<vmem>>, vector<1x32x32xf32>
    %8 = vector.shape_cast %7 : vector<1x32x32xf32> to vector<32x32xf32>
    %9 = arith.truncf %8 : vector<32x32xf32> to vector<32x32xbf16>
    %cst = arith.constant dense<0.000000e+00> : vector<16x32xf32>
    %10 = tpu.matmul %6, %9, %cst {dimension_numbers = #tpu.dot_dimension_numbers<[1], [0], [0], [1], [0, 0, 1, 1], [], []>} : vector<16x32xbf16>, vector<32x32xbf16>, vector<16x32xf32> -> vector<16x32xf32>
    %11 = arith.addf %3, %10 : vector<16x32xf32>
    %c0_8 = arith.constant 0 : index
    %c0_9 = arith.constant 0 : index
    %12 = vector.load %arg8[%c0_8, %c0_9] : memref<16x32xf32, #tpu.memory_space<vmem>>, vector<16x32xf32>
    tpu.vector_store %arg8[%c0_8, %c0_9], %11 {strides = array<i32>} : memref<16x32xf32, #tpu.memory_space<vmem>>, vector<16x32xf32>,
    %c0_i32_10 = arith.constant 0 : i32
    %13 = arith.cmpi eq, %arg3, %c0_i32_10 : i32
    %14 = arith.extui %13 : i1 to i32
    %c0_i32_11 = arith.constant 0 : i32
    %15 = arith.cmpi ne, %14, %c0_i32_11 : i32
    scf.if %15 {
      %c0_12 = arith.constant 0 : index
      %c0_13 = arith.constant 0 : index
      %16 = vector.load %arg8[%c0_12, %c0_13] : memref<16x32xf32, #tpu.memory_space<vmem>>, vector<16x32xf32>
      %c0_14 = arith.constant 0 : index
      %c0_15 = arith.constant 0 : index
      %c0_16 = arith.constant 0 : index
      %17 = vector.load %arg7[%c0_14, %c0_15, %c0_16] : memref<1x16x32xf32, #tpu.memory_space<vmem>>, vector<1x16x32xf32>
      %18 = vector.shape_cast %17 : vector<1x16x32xf32> to vector<16x32xf32>
      %19 = vector.shape_cast %16 : vector<16x32xf32> to vector<1x16x32xf32>
      tpu.vector_store %arg7[%c0_14, %c0_15, %c0_16], %19 {strides = array<i32>} : memref<1x16x32xf32, #tpu.memory_space<vmem>>, vector<1x16x32xf32>,
    } else {
    }
    return
  }
  func.func @transform_0(%arg0: i32, %arg1: i32, %arg2: i32, %arg3: i32) -> (i32, i32, i32) {
    %c0_i32 = arith.constant 0 : i32
    return %arg0, %arg1, %arg3 : i32, i32, i32
  }
  func.func @transform_1(%arg0: i32, %arg1: i32, %arg2: i32, %arg3: i32) -> (i32, i32, i32) {
    %c0_i32 = arith.constant 0 : i32
    return %arg0, %arg3, %arg2 : i32, i32, i32
  }
  func.func @transform_2(%arg0: i32, %arg1: i32, %arg2: i32, %arg3: i32) -> (i32, i32, i32) {
    %c0_i32 = arith.constant 0 : i32
    %c0_i32_0 = arith.constant 0 : i32
    return %arg0, %c0_i32, %arg2 : i32, i32, i32
  }
  func.func @transform_3(%arg0: i32, %arg1: i32, %arg2: i32, %arg3: i32) -> (i32, i32, i32) {
    %c0_i32 = arith.constant 0 : i32
    return %arg0, %arg1, %arg2 : i32, i32, i32
  }
}

module attributes {stable_mosaic.version = 11 : i64} {
  func.func @_mha_attn_kernel(%arg0: i32, %arg1: i32, %arg2: i32, %arg3: memref<1x8x32xf32, #tpu.memory_space<vmem>>, %arg4: memref<1x8x32xf32, #tpu.memory_space<vmem>>, %arg5: memref<1x8x32xf32, #tpu.memory_space<vmem>>, %arg6: memref<1x8x8xi8, #tpu.memory_space<vmem>>, %arg7: memref<1x8x32xf32, #tpu.memory_space<vmem>>, %arg8: memref<8x32xbf16, #tpu.memory_space<vmem>>, %arg9: memref<8x4xf32, #tpu.memory_space<vmem>>, %arg10: memref<8x4xf32, #tpu.memory_space<vmem>>, %arg11: memref<8x32xf32, #tpu.memory_space<vmem>>) attributes {dimension_semantics = [#tpu.dimension_semantics<parallel>, #tpu.dimension_semantics<parallel>, #tpu.dimension_semantics<arbitrary>], iteration_bounds = array<i64: 2, 1, 1>, scalar_prefetch = 0 : i64, scratch_operands = 4 : i64, tpu.core_type = #tpu.core_type<tc>, window_params = [{transform_indices = @transform_0, window_bounds = array<i64: 1, 8, 32>}, {transform_indices = @transform_1, window_bounds = array<i64: 1, 8, 32>}, {transform_indices = @transform_2, window_bounds = array<i64: 1, 8, 32>}, {transform_indices = @transform_3, window_bounds = array<i64: 1, 8, 8>}, {transform_indices = @transform_4, window_bounds = array<i64: 1, 8, 32>}]} {
    %c0_i32 = arith.constant 0 : i32
    %0 = arith.cmpi eq, %arg2, %c0_i32 : i32
    %1 = arith.extui %0 : i1 to i32
    %c0_i32_0 = arith.constant 0 : i32
    %2 = arith.cmpi ne, %1, %c0_i32_0 : i32
    scf.if %2 {
      %c0_80 = arith.constant 0 : index
      %c0_81 = arith.constant 0 : index
      %c0_82 = arith.constant 0 : index
      %132 = vector.load %arg3[%c0_80, %c0_81, %c0_82] : memref<1x8x32xf32, #tpu.memory_space<vmem>>, vector<1x8x32xf32>
      %133 = vector.shape_cast %132 : vector<1x8x32xf32> to vector<8x32xf32>
      %cst_83 = arith.constant 0.707106769 : f32
      %134 = vector.broadcast %cst_83 : f32 to vector<8x32xf32>
      %135 = arith.mulf %133, %134 : vector<8x32xf32>
      %136 = arith.truncf %135 : vector<8x32xf32> to vector<8x32xbf16>
      %c0_84 = arith.constant 0 : index
      %c0_85 = arith.constant 0 : index
      %137 = vector.load %arg8[%c0_84, %c0_85] : memref<8x32xbf16, #tpu.memory_space<vmem>>, vector<8x32xbf16>
      tpu.vector_store %arg8[%c0_84, %c0_85], %136 {strides = array<i32>} : memref<8x32xbf16, #tpu.memory_space<vmem>>, vector<8x32xbf16>,
      %cst_86 = arith.constant 0xFF800000 : f32
      %138 = vector.broadcast %cst_86 : f32 to vector<8x4xf32>
      %c0_87 = arith.constant 0 : index
      %c0_88 = arith.constant 0 : index
      %139 = vector.load %arg9[%c0_87, %c0_88] : memref<8x4xf32, #tpu.memory_space<vmem>>, vector<8x4xf32>
      tpu.vector_store %arg9[%c0_87, %c0_88], %138 {strides = array<i32>} : memref<8x4xf32, #tpu.memory_space<vmem>>, vector<8x4xf32>,
      %cst_89 = arith.constant 0.000000e+00 : f32
      %140 = vector.broadcast %cst_89 : f32 to vector<8x4xf32>
      %c0_90 = arith.constant 0 : index
      %c0_91 = arith.constant 0 : index
      %141 = vector.load %arg10[%c0_90, %c0_91] : memref<8x4xf32, #tpu.memory_space<vmem>>, vector<8x4xf32>
      tpu.vector_store %arg10[%c0_90, %c0_91], %140 {strides = array<i32>} : memref<8x4xf32, #tpu.memory_space<vmem>>, vector<8x4xf32>,
      %cst_92 = arith.constant 0.000000e+00 : f32
      %142 = vector.broadcast %cst_92 : f32 to vector<8x32xf32>
      %c0_93 = arith.constant 0 : index
      %c0_94 = arith.constant 0 : index
      %143 = vector.load %arg11[%c0_93, %c0_94] : memref<8x32xf32, #tpu.memory_space<vmem>>, vector<8x32xf32>
      tpu.vector_store %arg11[%c0_93, %c0_94], %142 {strides = array<i32>} : memref<8x32xf32, #tpu.memory_space<vmem>>, vector<8x32xf32>,
    } else {
    }
    %c0 = arith.constant 0 : index
    %c0_1 = arith.constant 0 : index
    %c0_2 = arith.constant 0 : index
    %3 = vector.load %arg4[%c0, %c0_1, %c0_2] : memref<1x8x32xf32, #tpu.memory_space<vmem>>, vector<1x8x32xf32>
    %4 = vector.shape_cast %3 : vector<1x8x32xf32> to vector<8x32xf32>
    %5 = arith.truncf %4 : vector<8x32xf32> to vector<8x32xbf16>
    %c0_3 = arith.constant 0 : index
    %c0_4 = arith.constant 0 : index
    %c0_5 = arith.constant 0 : index
    %6 = vector.load %arg5[%c0_3, %c0_4, %c0_5] : memref<1x8x32xf32, #tpu.memory_space<vmem>>, vector<1x8x32xf32>
    %7 = vector.shape_cast %6 : vector<1x8x32xf32> to vector<8x32xf32>
    %8 = arith.truncf %7 : vector<8x32xf32> to vector<8x32xbf16>
    %c0_6 = arith.constant 0 : index
    %c0_7 = arith.constant 0 : index
    %c0_8 = arith.constant 0 : index
    %9 = vector.load %arg6[%c0_6, %c0_7, %c0_8] : memref<1x8x8xi8, #tpu.memory_space<vmem>>, vector<1x8x8xi8>
    %10 = vector.shape_cast %9 : vector<1x8x8xi8> to vector<8x8xi8>
    %c0_i8 = arith.constant 0 : i8
    %11 = vector.broadcast %c0_i8 : i8 to vector<8x8xi8>
    %12 = arith.cmpi ne, %10, %11 : vector<8x8xi8>
    %c0_9 = arith.constant 0 : index
    %c0_10 = arith.constant 0 : index
    %13 = vector.load %arg8[%c0_9, %c0_10] : memref<8x32xbf16, #tpu.memory_space<vmem>>, vector<8x8xbf16>
    %14 = vector.extract_strided_slice %5 {offsets = [0, 0], sizes = [8, 8], strides = [1, 1]} : vector<8x32xbf16> to vector<8x8xbf16>
    %cst = arith.constant dense<0.000000e+00> : vector<8x8xf32>
    %15 = tpu.matmul %13, %14, %cst {dimension_numbers = #tpu.dot_dimension_numbers<[1], [1], [0], [0], [0, 0, 1, 0], [], []>} : vector<8x8xbf16>, vector<8x8xbf16>, vector<8x8xf32> -> vector<8x8xf32>
    %cst_11 = arith.constant -1.000000e+09 : f32
    %16 = vector.broadcast %cst_11 : f32 to vector<8x8xf32>
    %17 = arith.select %12, %16, %15 : vector<8x8xi1>, vector<8x8xf32>
    %c0_12 = arith.constant 0 : index
    %c0_13 = arith.constant 0 : index
    %18 = vector.load %arg9[%c0_12, %c0_13] : memref<8x4xf32, #tpu.memory_space<vmem>>, vector<8x1xf32>
    %cst_14 = arith.constant dense<0xFF800000> : vector<8xf32>
    %19 = vector.multi_reduction <maximumf>, %17, %cst_14 [1] : vector<8x8xf32> to vector<8xf32>
    %20 = vector.shape_cast %19 : vector<8xf32> to vector<8x1xf32>
    %21 = arith.maximumf %18, %20 : vector<8x1xf32>
    %22 = arith.subf %18, %21 : vector<8x1xf32>
    %23 = math.exp %22 : vector<8x1xf32>
    %24 = vector.broadcast %21 : vector<8x1xf32> to vector<8x8xf32>
    %25 = arith.subf %17, %24 : vector<8x8xf32>
    %26 = math.exp %25 : vector<8x8xf32>
    %c0_15 = arith.constant 0 : index
    %c0_16 = arith.constant 0 : index
    %27 = vector.load %arg10[%c0_15, %c0_16] : memref<8x4xf32, #tpu.memory_space<vmem>>, vector<8x1xf32>
    %28 = arith.mulf %23, %27 : vector<8x1xf32>
    %cst_17 = arith.constant dense<0.000000e+00> : vector<8xf32>
    %29 = vector.multi_reduction <add>, %26, %cst_17 [1] : vector<8x8xf32> to vector<8xf32>
    %30 = vector.shape_cast %29 : vector<8xf32> to vector<8x1xf32>
    %31 = arith.addf %28, %30 : vector<8x1xf32>
    %c0_18 = arith.constant 0 : index
    %c0_19 = arith.constant 0 : index
    %32 = vector.load %arg10[%c0_18, %c0_19] : memref<8x4xf32, #tpu.memory_space<vmem>>, vector<8x1xf32>
    tpu.vector_store %arg10[%c0_18, %c0_19], %31 {strides = array<i32>} : memref<8x4xf32, #tpu.memory_space<vmem>>, vector<8x1xf32>,
    %33 = vector.extract_strided_slice %8 {offsets = [0, 0], sizes = [8, 8], strides = [1, 1]} : vector<8x32xbf16> to vector<8x8xbf16>
    %34 = arith.truncf %26 : vector<8x8xf32> to vector<8x8xbf16>
    %cst_20 = arith.constant dense<0.000000e+00> : vector<8x8xf32>
    %35 = tpu.matmul %34, %33, %cst_20 {dimension_numbers = #tpu.dot_dimension_numbers<[1], [0], [0], [1], [0, 0, 1, 1], [], []>} : vector<8x8xbf16>, vector<8x8xbf16>, vector<8x8xf32> -> vector<8x8xf32>
    %c0_21 = arith.constant 0 : index
    %c0_22 = arith.constant 0 : index
    %36 = vector.load %arg11[%c0_21, %c0_22] : memref<8x32xf32, #tpu.memory_space<vmem>>, vector<8x8xf32>
    %37 = vector.broadcast %23 : vector<8x1xf32> to vector<8x8xf32>
    %38 = arith.mulf %37, %36 : vector<8x8xf32>
    %39 = arith.addf %38, %35 : vector<8x8xf32>
    %c0_23 = arith.constant 0 : index
    %c0_24 = arith.constant 0 : index
    %40 = vector.load %arg11[%c0_23, %c0_24] : memref<8x32xf32, #tpu.memory_space<vmem>>, vector<8x8xf32>
    tpu.vector_store %arg11[%c0_23, %c0_24], %39 {strides = array<i32>} : memref<8x32xf32, #tpu.memory_space<vmem>>, vector<8x8xf32>,
    %c0_25 = arith.constant 0 : index
    %c0_26 = arith.constant 0 : index
    %41 = vector.load %arg9[%c0_25, %c0_26] : memref<8x4xf32, #tpu.memory_space<vmem>>, vector<8x1xf32>
    tpu.vector_store %arg9[%c0_25, %c0_26], %21 {strides = array<i32>} : memref<8x4xf32, #tpu.memory_space<vmem>>, vector<8x1xf32>,
    %c0_27 = arith.constant 0 : index
    %c8 = arith.constant 8 : index
    %42 = vector.load %arg8[%c0_27, %c8] : memref<8x32xbf16, #tpu.memory_space<vmem>>, vector<8x8xbf16>
    %43 = vector.extract_strided_slice %5 {offsets = [0, 8], sizes = [8, 8], strides = [1, 1]} : vector<8x32xbf16> to vector<8x8xbf16>
    %cst_28 = arith.constant dense<0.000000e+00> : vector<8x8xf32>
    %44 = tpu.matmul %42, %43, %cst_28 {dimension_numbers = #tpu.dot_dimension_numbers<[1], [1], [0], [0], [0, 0, 1, 0], [], []>} : vector<8x8xbf16>, vector<8x8xbf16>, vector<8x8xf32> -> vector<8x8xf32>
    %cst_29 = arith.constant -1.000000e+09 : f32
    %45 = vector.broadcast %cst_29 : f32 to vector<8x8xf32>
    %46 = arith.select %12, %45, %44 : vector<8x8xi1>, vector<8x8xf32>
    %c0_30 = arith.constant 0 : index
    %c1 = arith.constant 1 : index
    %47 = vector.load %arg9[%c0_30, %c1] : memref<8x4xf32, #tpu.memory_space<vmem>>, vector<8x1xf32>
    %cst_31 = arith.constant dense<0xFF800000> : vector<8xf32>
    %48 = vector.multi_reduction <maximumf>, %46, %cst_31 [1] : vector<8x8xf32> to vector<8xf32>
    %49 = vector.shape_cast %48 : vector<8xf32> to vector<8x1xf32>
    %50 = arith.maximumf %47, %49 : vector<8x1xf32>
    %51 = arith.subf %47, %50 : vector<8x1xf32>
    %52 = math.exp %51 : vector<8x1xf32>
    %53 = vector.broadcast %50 : vector<8x1xf32> to vector<8x8xf32>
    %54 = arith.subf %46, %53 : vector<8x8xf32>
    %55 = math.exp %54 : vector<8x8xf32>
    %c0_32 = arith.constant 0 : index
    %c1_33 = arith.constant 1 : index
    %56 = vector.load %arg10[%c0_32, %c1_33] : memref<8x4xf32, #tpu.memory_space<vmem>>, vector<8x1xf32>
    %57 = arith.mulf %52, %56 : vector<8x1xf32>
    %cst_34 = arith.constant dense<0.000000e+00> : vector<8xf32>
    %58 = vector.multi_reduction <add>, %55, %cst_34 [1] : vector<8x8xf32> to vector<8xf32>
    %59 = vector.shape_cast %58 : vector<8xf32> to vector<8x1xf32>
    %60 = arith.addf %57, %59 : vector<8x1xf32>
    %c0_35 = arith.constant 0 : index
    %c1_36 = arith.constant 1 : index
    %61 = vector.load %arg10[%c0_35, %c1_36] : memref<8x4xf32, #tpu.memory_space<vmem>>, vector<8x1xf32>
    tpu.vector_store %arg10[%c0_35, %c1_36], %60 {strides = array<i32>} : memref<8x4xf32, #tpu.memory_space<vmem>>, vector<8x1xf32>,
    %62 = vector.extract_strided_slice %8 {offsets = [0, 8], sizes = [8, 8], strides = [1, 1]} : vector<8x32xbf16> to vector<8x8xbf16>
    %63 = arith.truncf %55 : vector<8x8xf32> to vector<8x8xbf16>
    %cst_37 = arith.constant dense<0.000000e+00> : vector<8x8xf32>
    %64 = tpu.matmul %63, %62, %cst_37 {dimension_numbers = #tpu.dot_dimension_numbers<[1], [0], [0], [1], [0, 0, 1, 1], [], []>} : vector<8x8xbf16>, vector<8x8xbf16>, vector<8x8xf32> -> vector<8x8xf32>
    %c0_38 = arith.constant 0 : index
    %c8_39 = arith.constant 8 : index
    %65 = vector.load %arg11[%c0_38, %c8_39] : memref<8x32xf32, #tpu.memory_space<vmem>>, vector<8x8xf32>
    %66 = vector.broadcast %52 : vector<8x1xf32> to vector<8x8xf32>
    %67 = arith.mulf %66, %65 : vector<8x8xf32>
    %68 = arith.addf %67, %64 : vector<8x8xf32>
    %c0_40 = arith.constant 0 : index
    %c8_41 = arith.constant 8 : index
    %69 = vector.load %arg11[%c0_40, %c8_41] : memref<8x32xf32, #tpu.memory_space<vmem>>, vector<8x8xf32>
    tpu.vector_store %arg11[%c0_40, %c8_41], %68 {strides = array<i32>} : memref<8x32xf32, #tpu.memory_space<vmem>>, vector<8x8xf32>,
    %c0_42 = arith.constant 0 : index
    %c1_43 = arith.constant 1 : index
    %70 = vector.load %arg9[%c0_42, %c1_43] : memref<8x4xf32, #tpu.memory_space<vmem>>, vector<8x1xf32>
    tpu.vector_store %arg9[%c0_42, %c1_43], %50 {strides = array<i32>} : memref<8x4xf32, #tpu.memory_space<vmem>>, vector<8x1xf32>,
    %c0_44 = arith.constant 0 : index
    %c16 = arith.constant 16 : index
    %71 = vector.load %arg8[%c0_44, %c16] : memref<8x32xbf16, #tpu.memory_space<vmem>>, vector<8x8xbf16>
    %72 = vector.extract_strided_slice %5 {offsets = [0, 16], sizes = [8, 8], strides = [1, 1]} : vector<8x32xbf16> to vector<8x8xbf16>
    %cst_45 = arith.constant dense<0.000000e+00> : vector<8x8xf32>
    %73 = tpu.matmul %71, %72, %cst_45 {dimension_numbers = #tpu.dot_dimension_numbers<[1], [1], [0], [0], [0, 0, 1, 0], [], []>} : vector<8x8xbf16>, vector<8x8xbf16>, vector<8x8xf32> -> vector<8x8xf32>
    %cst_46 = arith.constant -1.000000e+09 : f32
    %74 = vector.broadcast %cst_46 : f32 to vector<8x8xf32>
    %75 = arith.select %12, %74, %73 : vector<8x8xi1>, vector<8x8xf32>
    %c0_47 = arith.constant 0 : index
    %c2 = arith.constant 2 : index
    %76 = vector.load %arg9[%c0_47, %c2] : memref<8x4xf32, #tpu.memory_space<vmem>>, vector<8x1xf32>
    %cst_48 = arith.constant dense<0xFF800000> : vector<8xf32>
    %77 = vector.multi_reduction <maximumf>, %75, %cst_48 [1] : vector<8x8xf32> to vector<8xf32>
    %78 = vector.shape_cast %77 : vector<8xf32> to vector<8x1xf32>
    %79 = arith.maximumf %76, %78 : vector<8x1xf32>
    %80 = arith.subf %76, %79 : vector<8x1xf32>
    %81 = math.exp %80 : vector<8x1xf32>
    %82 = vector.broadcast %79 : vector<8x1xf32> to vector<8x8xf32>
    %83 = arith.subf %75, %82 : vector<8x8xf32>
    %84 = math.exp %83 : vector<8x8xf32>
    %c0_49 = arith.constant 0 : index
    %c2_50 = arith.constant 2 : index
    %85 = vector.load %arg10[%c0_49, %c2_50] : memref<8x4xf32, #tpu.memory_space<vmem>>, vector<8x1xf32>
    %86 = arith.mulf %81, %85 : vector<8x1xf32>
    %cst_51 = arith.constant dense<0.000000e+00> : vector<8xf32>
    %87 = vector.multi_reduction <add>, %84, %cst_51 [1] : vector<8x8xf32> to vector<8xf32>
    %88 = vector.shape_cast %87 : vector<8xf32> to vector<8x1xf32>
    %89 = arith.addf %86, %88 : vector<8x1xf32>
    %c0_52 = arith.constant 0 : index
    %c2_53 = arith.constant 2 : index
    %90 = vector.load %arg10[%c0_52, %c2_53] : memref<8x4xf32, #tpu.memory_space<vmem>>, vector<8x1xf32>
    tpu.vector_store %arg10[%c0_52, %c2_53], %89 {strides = array<i32>} : memref<8x4xf32, #tpu.memory_space<vmem>>, vector<8x1xf32>,
    %91 = vector.extract_strided_slice %8 {offsets = [0, 16], sizes = [8, 8], strides = [1, 1]} : vector<8x32xbf16> to vector<8x8xbf16>
    %92 = arith.truncf %84 : vector<8x8xf32> to vector<8x8xbf16>
    %cst_54 = arith.constant dense<0.000000e+00> : vector<8x8xf32>
    %93 = tpu.matmul %92, %91, %cst_54 {dimension_numbers = #tpu.dot_dimension_numbers<[1], [0], [0], [1], [0, 0, 1, 1], [], []>} : vector<8x8xbf16>, vector<8x8xbf16>, vector<8x8xf32> -> vector<8x8xf32>
    %c0_55 = arith.constant 0 : index
    %c16_56 = arith.constant 16 : index
    %94 = vector.load %arg11[%c0_55, %c16_56] : memref<8x32xf32, #tpu.memory_space<vmem>>, vector<8x8xf32>
    %95 = vector.broadcast %81 : vector<8x1xf32> to vector<8x8xf32>
    %96 = arith.mulf %95, %94 : vector<8x8xf32>
    %97 = arith.addf %96, %93 : vector<8x8xf32>
    %c0_57 = arith.constant 0 : index
    %c16_58 = arith.constant 16 : index
    %98 = vector.load %arg11[%c0_57, %c16_58] : memref<8x32xf32, #tpu.memory_space<vmem>>, vector<8x8xf32>
    tpu.vector_store %arg11[%c0_57, %c16_58], %97 {strides = array<i32>} : memref<8x32xf32, #tpu.memory_space<vmem>>, vector<8x8xf32>,
    %c0_59 = arith.constant 0 : index
    %c2_60 = arith.constant 2 : index
    %99 = vector.load %arg9[%c0_59, %c2_60] : memref<8x4xf32, #tpu.memory_space<vmem>>, vector<8x1xf32>
    tpu.vector_store %arg9[%c0_59, %c2_60], %79 {strides = array<i32>} : memref<8x4xf32, #tpu.memory_space<vmem>>, vector<8x1xf32>,
    %c0_61 = arith.constant 0 : index
    %c24 = arith.constant 24 : index
    %100 = vector.load %arg8[%c0_61, %c24] : memref<8x32xbf16, #tpu.memory_space<vmem>>, vector<8x8xbf16>
    %101 = vector.extract_strided_slice %5 {offsets = [0, 24], sizes = [8, 8], strides = [1, 1]} : vector<8x32xbf16> to vector<8x8xbf16>
    %cst_62 = arith.constant dense<0.000000e+00> : vector<8x8xf32>
    %102 = tpu.matmul %100, %101, %cst_62 {dimension_numbers = #tpu.dot_dimension_numbers<[1], [1], [0], [0], [0, 0, 1, 0], [], []>} : vector<8x8xbf16>, vector<8x8xbf16>, vector<8x8xf32> -> vector<8x8xf32>
    %cst_63 = arith.constant -1.000000e+09 : f32
    %103 = vector.broadcast %cst_63 : f32 to vector<8x8xf32>
    %104 = arith.select %12, %103, %102 : vector<8x8xi1>, vector<8x8xf32>
    %c0_64 = arith.constant 0 : index
    %c3 = arith.constant 3 : index
    %105 = vector.load %arg9[%c0_64, %c3] : memref<8x4xf32, #tpu.memory_space<vmem>>, vector<8x1xf32>
    %cst_65 = arith.constant dense<0xFF800000> : vector<8xf32>
    %106 = vector.multi_reduction <maximumf>, %104, %cst_65 [1] : vector<8x8xf32> to vector<8xf32>
    %107 = vector.shape_cast %106 : vector<8xf32> to vector<8x1xf32>
    %108 = arith.maximumf %105, %107 : vector<8x1xf32>
    %109 = arith.subf %105, %108 : vector<8x1xf32>
    %110 = math.exp %109 : vector<8x1xf32>
    %111 = vector.broadcast %108 : vector<8x1xf32> to vector<8x8xf32>
    %112 = arith.subf %104, %111 : vector<8x8xf32>
    %113 = math.exp %112 : vector<8x8xf32>
    %c0_66 = arith.constant 0 : index
    %c3_67 = arith.constant 3 : index
    %114 = vector.load %arg10[%c0_66, %c3_67] : memref<8x4xf32, #tpu.memory_space<vmem>>, vector<8x1xf32>
    %115 = arith.mulf %110, %114 : vector<8x1xf32>
    %cst_68 = arith.constant dense<0.000000e+00> : vector<8xf32>
    %116 = vector.multi_reduction <add>, %113, %cst_68 [1] : vector<8x8xf32> to vector<8xf32>
    %117 = vector.shape_cast %116 : vector<8xf32> to vector<8x1xf32>
    %118 = arith.addf %115, %117 : vector<8x1xf32>
    %c0_69 = arith.constant 0 : index
    %c3_70 = arith.constant 3 : index
    %119 = vector.load %arg10[%c0_69, %c3_70] : memref<8x4xf32, #tpu.memory_space<vmem>>, vector<8x1xf32>
    tpu.vector_store %arg10[%c0_69, %c3_70], %118 {strides = array<i32>} : memref<8x4xf32, #tpu.memory_space<vmem>>, vector<8x1xf32>,
    %120 = vector.extract_strided_slice %8 {offsets = [0, 24], sizes = [8, 8], strides = [1, 1]} : vector<8x32xbf16> to vector<8x8xbf16>
    %121 = arith.truncf %113 : vector<8x8xf32> to vector<8x8xbf16>
    %cst_71 = arith.constant dense<0.000000e+00> : vector<8x8xf32>
    %122 = tpu.matmul %121, %120, %cst_71 {dimension_numbers = #tpu.dot_dimension_numbers<[1], [0], [0], [1], [0, 0, 1, 1], [], []>} : vector<8x8xbf16>, vector<8x8xbf16>, vector<8x8xf32> -> vector<8x8xf32>
    %c0_72 = arith.constant 0 : index
    %c24_73 = arith.constant 24 : index
    %123 = vector.load %arg11[%c0_72, %c24_73] : memref<8x32xf32, #tpu.memory_space<vmem>>, vector<8x8xf32>
    %124 = vector.broadcast %110 : vector<8x1xf32> to vector<8x8xf32>
    %125 = arith.mulf %124, %123 : vector<8x8xf32>
    %126 = arith.addf %125, %122 : vector<8x8xf32>
    %c0_74 = arith.constant 0 : index
    %c24_75 = arith.constant 24 : index
    %127 = vector.load %arg11[%c0_74, %c24_75] : memref<8x32xf32, #tpu.memory_space<vmem>>, vector<8x8xf32>
    tpu.vector_store %arg11[%c0_74, %c24_75], %126 {strides = array<i32>} : memref<8x32xf32, #tpu.memory_space<vmem>>, vector<8x8xf32>,
    %c0_76 = arith.constant 0 : index
    %c3_77 = arith.constant 3 : index
    %128 = vector.load %arg9[%c0_76, %c3_77] : memref<8x4xf32, #tpu.memory_space<vmem>>, vector<8x1xf32>
    tpu.vector_store %arg9[%c0_76, %c3_77], %108 {strides = array<i32>} : memref<8x4xf32, #tpu.memory_space<vmem>>, vector<8x1xf32>,
    %c0_i32_78 = arith.constant 0 : i32
    %129 = arith.cmpi eq, %arg2, %c0_i32_78 : i32
    %130 = arith.extui %129 : i1 to i32
    %c0_i32_79 = arith.constant 0 : i32
    %131 = arith.cmpi ne, %130, %c0_i32_79 : i32
    scf.if %131 {
      %c0_80 = arith.constant 0 : index
      %c0_81 = arith.constant 0 : index
      %132 = vector.load %arg10[%c0_80, %c0_81] : memref<8x4xf32, #tpu.memory_space<vmem>>, vector<8x4xf32>
      %133 = tpu.reciprocal %132 {approx = true} : vector<8x4xf32> -> vector<8x4xf32>
      %c0_82 = arith.constant 0 : index
      %c0_83 = arith.constant 0 : index
      %134 = vector.load %arg11[%c0_82, %c0_83] : memref<8x32xf32, #tpu.memory_space<vmem>>, vector<8x8xf32>
      %135 = vector.extract_strided_slice %133 {offsets = [0, 0], sizes = [8, 1], strides = [1, 1]} : vector<8x4xf32> to vector<8x1xf32>
      %136 = vector.broadcast %135 : vector<8x1xf32> to vector<8x8xf32>
      %137 = arith.mulf %134, %136 : vector<8x8xf32>
      %c0_84 = arith.constant 0 : index
      %c8_85 = arith.constant 8 : index
      %138 = vector.load %arg11[%c0_84, %c8_85] : memref<8x32xf32, #tpu.memory_space<vmem>>, vector<8x8xf32>
      %139 = vector.extract_strided_slice %133 {offsets = [0, 1], sizes = [8, 1], strides = [1, 1]} : vector<8x4xf32> to vector<8x1xf32>
      %140 = vector.broadcast %139 : vector<8x1xf32> to vector<8x8xf32>
      %141 = arith.mulf %138, %140 : vector<8x8xf32>
      %c0_86 = arith.constant 0 : index
      %c16_87 = arith.constant 16 : index
      %142 = vector.load %arg11[%c0_86, %c16_87] : memref<8x32xf32, #tpu.memory_space<vmem>>, vector<8x8xf32>
      %143 = vector.extract_strided_slice %133 {offsets = [0, 2], sizes = [8, 1], strides = [1, 1]} : vector<8x4xf32> to vector<8x1xf32>
      %144 = vector.broadcast %143 : vector<8x1xf32> to vector<8x8xf32>
      %145 = arith.mulf %142, %144 : vector<8x8xf32>
      %c0_88 = arith.constant 0 : index
      %c24_89 = arith.constant 24 : index
      %146 = vector.load %arg11[%c0_88, %c24_89] : memref<8x32xf32, #tpu.memory_space<vmem>>, vector<8x8xf32>
      %147 = vector.extract_strided_slice %133 {offsets = [0, 3], sizes = [8, 1], strides = [1, 1]} : vector<8x4xf32> to vector<8x1xf32>
      %148 = vector.broadcast %147 : vector<8x1xf32> to vector<8x8xf32>
      %149 = arith.mulf %146, %148 : vector<8x8xf32>
      %150 = tpu.concatenate %137, %141, %145, %149 in 1 : vector<8x8xf32>, vector<8x8xf32>, vector<8x8xf32>, vector<8x8xf32> -> vector<8x32xf32>
      %c0_90 = arith.constant 0 : index
      %c0_91 = arith.constant 0 : index
      %c0_92 = arith.constant 0 : index
      %151 = vector.load %arg7[%c0_90, %c0_91, %c0_92] : memref<1x8x32xf32, #tpu.memory_space<vmem>>, vector<1x8x32xf32>
      %152 = vector.shape_cast %151 : vector<1x8x32xf32> to vector<8x32xf32>
      %153 = vector.shape_cast %150 : vector<8x32xf32> to vector<1x8x32xf32>
      tpu.vector_store %arg7[%c0_90, %c0_91, %c0_92], %153 {strides = array<i32>} : memref<1x8x32xf32, #tpu.memory_space<vmem>>, vector<1x8x32xf32>,
    } else {
    }
    return
  }
  func.func @transform_0(%arg0: i32, %arg1: i32, %arg2: i32) -> (i32, i32, i32) {
    %c0_i32 = arith.constant 0 : i32
    %c0_i32_0 = arith.constant 0 : i32
    return %arg0, %arg1, %c0_i32 : i32, i32, i32
  }
  func.func @transform_1(%arg0: i32, %arg1: i32, %arg2: i32) -> (i32, i32, i32) {
    %c0_i32 = arith.constant 0 : i32
    %c0_i32_0 = arith.constant 0 : i32
    return %arg0, %arg2, %c0_i32 : i32, i32, i32
  }
  func.func @transform_2(%arg0: i32, %arg1: i32, %arg2: i32) -> (i32, i32, i32) {
    %c0_i32 = arith.constant 0 : i32
    %c0_i32_0 = arith.constant 0 : i32
    return %arg0, %arg2, %c0_i32 : i32, i32, i32
  }
  func.func @transform_3(%arg0: i32, %arg1: i32, %arg2: i32) -> (i32, i32, i32) {
    %c0_i32 = arith.constant 0 : i32
    return %arg0, %arg1, %arg2 : i32, i32, i32
  }
  func.func @transform_4(%arg0: i32, %arg1: i32, %arg2: i32) -> (i32, i32, i32) {
    %c0_i32 = arith.constant 0 : i32
    %c0_i32_0 = arith.constant 0 : i32
    return %arg0, %arg1, %c0_i32 : i32, i32, i32
  }
}

</mosaic_0001>

<llo_original>
// kernel: multi_head_attention.5
$region0: #{multi_head_attention.5}
  #allocation0 [shape = 'u32[]', space=smem, size = 0x4, offset = 0x4, fixed_abs, tag = 'smem constant byte address 0x4 - core index']
  #allocation1 [shape = 'u32[144,128]{1,0:T(1,128)}', space=vmem, size = 0x12000, scoped, tag = 'internal scratch']
  #allocation2 [shape = 'f32[16,32]{1,0:T(8,128)}', space=vmem, size = 0x2000, scoped, tag = 'scratch operand']
  %s0 = inlined_call_operand.vmem [shape: f32[1,16,32], index: 0, kind: input, shape index: {}]
  %s1 = inlined_call_operand.vmem [shape: f32[1,32,32], index: 1, kind: input, shape index: {}]
  %s2 = inlined_call_operand.vmem [shape: f32[1,1,32], index: 2, kind: input, shape index: {}]
  %s3 = inlined_call_operand.hbm [shape: f32[1,16,32], index: 3, kind: output, shape index: {}]
  %s4 = sld [smem:[#allocation0]]
  $region30: #{multi_head_attention.5} parent=0
    _
  %s6 = ssub.s32 1, %s4
  %s7 = scalar_select 0, %s6, %s4
  $region1: #{multi_head_attention.5} parent=0
    #allocation3 [shape = 'u8[8192]{0}', space=vmem, size = 0x2000, scoped, tag = 'output window, operand 0, single buffered']
    #allocation4 [shape = 's32[1]{0}', space=sflag, size = 0x4, scoped, tag = 'scoped memory for multi_head_attention.5']
    %8 = vsyncpa [#allocation4], 0
    // Predicated region
    $region2: #{multi_head_attention.5} parent=1 // pred_check
      _
    $region3: #{multi_head_attention.5} parent=1 // pred_check_branch
      %10 = sbr.rel (0) target = $region5
    $region4: #{multi_head_attention.5} parent=1 // pred_region
      _
    $region5: #{multi_head_attention.5} parent=1 // pred_fallthru
      _
    // Predicated region
    $region6: #{multi_head_attention.5} parent=1 // pred_check
      _
    $region7: #{multi_head_attention.5} parent=1 // pred_check_branch
      %12 = sbr.rel (0) target = $region9
    $region8: #{multi_head_attention.5} parent=1 // pred_region
      _
    $region9: #{multi_head_attention.5} parent=1 // pred_fallthru
      _
    // Predicated region
    $region10: #{multi_head_attention.5} parent=1 // pred_check
      _
    $region11: #{multi_head_attention.5} parent=1 // pred_check_branch
      %14 = sbr.rel (0) target = $region13
    $region12: #{multi_head_attention.5} parent=1 // pred_region
      _
    $region13: #{multi_head_attention.5} parent=1 // pred_fallthru
      _
    %p16 = scmp.eq.s32.totalorder 0, 0
    // Predicated region
    $region14: #{multi_head_attention.5} parent=1 // pred_check
      %p17 = pneg %p16
    $region15: #{multi_head_attention.5} parent=1 // pred_check_branch
      %19 = sbr.rel (%p17) target = $region17
    $region16: #{multi_head_attention.5} parent=1 // pred_region
      %v20 = vld [vmem:[%s2] sm:$0x1]
      %v22 = vlaneseq
      %v23 = vshrl.u32 %v22, 7
      %v24 = vsub.s32 0, %v23
      %v25 = vrot.slane %v20, %v24
      %vm27 = vcmask 261120
      %28 = vst.msk [vmem:[#allocation2] sm:$0xff] %vm27, %v25
      %29 = vst.msk [vmem:[#allocation2 + $0x8] sm:$0xff] %vm27, %v25
    $region17: #{multi_head_attention.5} parent=1 // pred_fallthru
      _
    %v30 = vld [vmem:[#allocation2] sm:$0xff]
    %v31 = vld [vmem:[#allocation2 + $0x8] sm:$0xff]
    %v32 = vld [vmem:[%s0] sm:$0xff]
    %v33 = vld [vmem:[%s0 + $0x8] sm:$0xff]
    %v34 = vpack.c.bf16 %v33, %v32
    %v35 = vld [vmem:[%s1] sm:$0xff]
    %v36 = vld [vmem:[%s1 + $0x8] sm:$0xff]
    %v37 = vld [vmem:[%s1 + $0x10] sm:$0xff]
    %v38 = vld [vmem:[%s1 + $0x18] sm:$0xff]
    %v39 = vpack.c.bf16 %v36, %v35
    %v40 = vpack.c.bf16 %v38, %v37
    %vm41 = vcmask 261120
    %v43 = vsel %vm41, %v34, 0
    %45 = vmatprep.subr.bf16.mxu0 0
    %46 = vmatpush1.bf16.msra.mxu0 0
    %47 = vmatprep.subr.bf16.mxu0 0
    %48 = vmatpush1.bf16.msra.mxu0 0
    %49 = vmatprep.subr.bf16.mxu0 0
    %50 = vmatpush1.bf16.msra.mxu0 0
    %51 = vmatprep.subr.bf16.mxu0 0
    %52 = vmatpush1.bf16.msra.mxu0 0
    %53 = vmatprep.subr.bf16.mxu0 0
    %54 = vmatpush1.bf16.msra.mxu0 0
    %55 = vmatprep.subr.bf16.mxu0 0
    %56 = vmatpush1.bf16.msra.mxu0 0
    %57 = vmatprep.subr.bf16.mxu0 0
    %58 = vmatpush1.bf16.msra.mxu0 %v40
    %59 = vmatprep.subr.bf16.mxu0 0
    %60 = vmatpush1.bf16.msra.mxu0 %v39
    %61 = vmatprep.subr.bf16.mxu0 0
    %62 = vmatpush2.bf16.msra.mxu0 0
    %63 = vmatprep.subr.bf16.mxu0 0
    %64 = vmatpush2.bf16.msra.mxu0 0
    %65 = vmatprep.subr.bf16.mxu0 0
    %66 = vmatpush2.bf16.msra.mxu0 0
    %67 = vmatprep.subr.bf16.mxu0 0
    %68 = vmatpush2.bf16.msra.mxu0 0
    %69 = vmatprep.subr.bf16.mxu0 0
    %70 = vmatpush2.bf16.msra.mxu0 0
    %71 = vmatprep.subr.bf16.mxu0 0
    %72 = vmatpush2.bf16.msra.mxu0 0
    %73 = vmatprep.subr.bf16.mxu0 0
    %74 = vmatpush2.bf16.msra.mxu0 0
    %75 = vmatprep.subr.bf16.mxu0 0
    %76 = vmatpush2.bf16.msra.mxu0 0
    %77 = vmatprep.mubr.bf16.mxu0 0
    %78 = vmatmul.mubr.bf16.gmra.mxu0 %v43
    %v79 = vpop.f32.mrf.mxu0
    %v80 = vadd.f32 0.0, %v79
    %v81 = vpop.f32.mrf.mxu0
    %v82 = vpop.f32.mrf.mxu0
    %v83 = vadd.f32 0.0, %v82
    %v84 = vpop.f32.mrf.mxu0
    %85 = vdwg.mxu0
    %v86 = vadd.f32 %v30, %v80
    %v87 = vadd.f32 %v31, %v83
    %88 = vst.msk [vmem:[#allocation2] sm:$0xff] %vm41, %v86
    %89 = vst.msk [vmem:[#allocation2 + $0x8] sm:$0xff] %vm41, %v87
    // Predicated region
    $region18: #{multi_head_attention.5} parent=1 // pred_check
      %p90 = pneg %p16
    $region19: #{multi_head_attention.5} parent=1 // pred_check_branch
      %92 = sbr.rel (%p90) target = $region21
    $region20: #{multi_head_attention.5} parent=1 // pred_region
      %v93 = vld [vmem:[#allocation2] sm:$0xff]
      %v94 = vld [vmem:[#allocation2 + $0x8] sm:$0xff]
      %95 = vst.msk [vmem:[#allocation3] sm:$0xff] %vm41, %v93
      %96 = vst.msk [vmem:[#allocation3 + $0x8] sm:$0xff] %vm41, %v94
    $region21: #{multi_head_attention.5} parent=1 // pred_fallthru
      _
    // Predicated region
    $region22: #{multi_head_attention.5} parent=1 // pred_check
      _
    $region23: #{multi_head_attention.5} parent=1 // pred_check_branch
      %98 = sbr.rel (0) target = $region25
    $region24: #{multi_head_attention.5} parent=1 // pred_region
      %s100 = ssub.s32 256, 256
      %101 = vsyncadd [#allocation4], %s100
      %s102 = sshll.u32 [#allocation3], 4
      %s103 = int_to_ptr.vmem [resolvable:$true] %s102
      %108 = dma.vmem_to_hbm [thread:$0]  %s103, 256, %s3, [#allocation4], 128, 128, 8
    $region25: #{multi_head_attention.5} parent=1 // pred_fallthru
      _
    // Predicated region
    $region26: #{multi_head_attention.5} parent=1 // pred_check
      _
    $region27: #{multi_head_attention.5} parent=1 // pred_check_branch
      %110 = sbr.rel (0) target = $region29
    $region28: #{multi_head_attention.5} parent=1 // pred_region
      %111 = dma.done [#allocation4], 256
    $region29: #{multi_head_attention.5} parent=1 // pred_fallthru
      _
    %112 = vsyncpa [#allocation4], 1

// kernel: multi_head_attention.3
$region0: #{multi_head_attention.3}
  #allocation0 [shape = 'u32[]', space=smem, size = 0x4, offset = 0x4, fixed_abs, tag = 'smem constant byte address 0x4 - core index']
  #allocation1 [shape = 'u32[144,128]{1,0:T(1,128)}', space=vmem, size = 0x12000, scoped, tag = 'internal scratch']
  #allocation2 [shape = 'f32[16,32]{1,0:T(8,128)}', space=vmem, size = 0x2000, scoped, tag = 'scratch operand']
  %s0 = inlined_call_operand.vmem [shape: f32[3,16,32], index: 0, kind: input, shape index: {}]
  %s1 = inlined_call_operand.vmem [shape: f32[3,32,32], index: 1, kind: input, shape index: {}]
  %s2 = inlined_call_operand.vmem [shape: f32[3,16,32], index: 2, kind: output, shape index: {}]
  %s3 = sld [smem:[#allocation0]]
  $region49: #{multi_head_attention.3} parent=0
    _
  %s5 = ssub.s32 1, %s3
  %s6 = scalar_select 0, %s5, %s3
  loop: start=0, step=1, limit=5
  $region2: #{multi_head_attention.3} parent=0 // loop_pre_header
    _
  $region3: #{multi_head_attention.3} parent=0 // loop_header
    %s8 = sphi 0, %s12
    %p9 = scmp.ge.s32.totalorder %s8, 5
    %s15 = sphi 0, %s41
    %s16 = sphi 0, %s37
    %s17 = sphi 0, %s33
    %s18 = sphi 0, %s29
    %s19 = sphi 0, %s15
    %s20 = sphi 0, %s16
    %s21 = sphi 0, %s17
    %s22 = sphi 0, %s18
    %s23 = sphi 0, %s19
    %s24 = sphi 0, %s20
    %s25 = sphi 0, %s21
    %s26 = sphi 0, %s22
    %s48 = sphi 0, %s50
    %s51 = sphi 0, %s48
    %s52 = sphi 0, %s51
    %s68 = sphi 0, %s52
    %s78 = sphi 0, %s80
    %s81 = sphi 0, %s78
    %s82 = sphi 0, %s81
    %s98 = sphi 0, %s82
    %s108 = sphi 0, %s110
    %s111 = sphi 0, %s108
    %s112 = sphi 0, %s111
    %s128 = sphi 0, %s112
  $region4: #{multi_head_attention.3} parent=0 // loop_header_branch
    %11 = sbr.rel (%p9) target = $region8
  $region5: #{multi_head_attention.3} parent=0 // loop_body
    %s13 = ssub.s32 %s8, 1
    %s14 = ssub.s32 %s8, 2
    %s27 = sadd.s32 1, %s18
    %p28 = scmp.ge.s32.totalorder %s27, 1
    %s29 = scalar_select %p28, 0, %s27
    %s30 = sadd.s32 1, %s17
    %s31 = scalar_select %p28, %s30, %s17
    %p32 = scmp.ge.s32.totalorder %s31, 1
    %s33 = scalar_select %p32, 0, %s31
    %s34 = sadd.s32 1, %s16
    %s35 = scalar_select %p32, %s34, %s16
    %p36 = scmp.ge.s32.totalorder %s35, 1
    %s37 = scalar_select %p36, 0, %s35
    %s38 = sadd.s32 1, %s15
    %s39 = scalar_select %p36, %s38, %s15
    %p40 = scmp.ge.s32.totalorder %s39, 3
    %s41 = scalar_select %p40, 0, %s39
    %s42 = ssub.s32 %s15, %s41
    %s43 = ssub.s32 %s16, %s37
    %s44 = sor.u32 %s42, %s43
    %s45 = ssub.s32 %s18, %s29
    %s46 = sor.u32 %s44, %s45
    %p47 = scmp.eq.s32.totalorder %s46, 0
    %s49 = sadd.s32 %s48, 1
    %s50 = scalar_select %p47, %s48, %s49
    %p53 = pneg %p47
    %p54 = scmp.eq.s32.totalorder %s8, 2
    %p55 = por %p53, %p54
    %p56 = scmp.ne.s32.totalorder %s48, %s51
    %p57 = scmp.eq.s32.totalorder %s8, 0
    %p58 = por %p56, %p57
    %p59 = scmp.ne.s32.totalorder %s48, %s51
    %p60 = scmp.eq.s32.totalorder %s13, 2
    %p61 = por %p59, %p60
    %p62 = scmp.ne.s32.totalorder %s51, %s52
    %p63 = scmp.eq.s32.totalorder %s13, 0
    %p64 = por %p62, %p63
    %p65 = scmp.ne.s32.totalorder %s51, %s52
    %p66 = scmp.eq.s32.totalorder %s14, 2
    %p67 = por %p65, %p66
    %p69 = scmp.ne.s32.totalorder %s52, %s68
    %p70 = scmp.eq.s32.totalorder %s14, 0
    %p71 = por %p69, %p70
    %s72 = ssub.s32 %s15, %s41
    %s73 = ssub.s32 %s18, %s29
    %s74 = sor.u32 %s72, %s73
    %s75 = ssub.s32 %s17, %s33
    %s76 = sor.u32 %s74, %s75
    %p77 = scmp.eq.s32.totalorder %s76, 0
    %s79 = sadd.s32 %s78, 1
    %s80 = scalar_select %p77, %s78, %s79
    %p83 = pneg %p77
    %p84 = scmp.eq.s32.totalorder %s8, 2
    %p85 = por %p83, %p84
    %p86 = scmp.ne.s32.totalorder %s78, %s81
    %p87 = scmp.eq.s32.totalorder %s8, 0
    %p88 = por %p86, %p87
    %p89 = scmp.ne.s32.totalorder %s78, %s81
    %p90 = scmp.eq.s32.totalorder %s13, 2
    %p91 = por %p89, %p90
    %p92 = scmp.ne.s32.totalorder %s81, %s82
    %p93 = scmp.eq.s32.totalorder %s13, 0
    %p94 = por %p92, %p93
    %p95 = scmp.ne.s32.totalorder %s81, %s82
    %p96 = scmp.eq.s32.totalorder %s14, 2
    %p97 = por %p95, %p96
    %p99 = scmp.ne.s32.totalorder %s82, %s98
    %p100 = scmp.eq.s32.totalorder %s14, 0
    %p101 = por %p99, %p100
    %s102 = ssub.s32 %s15, %s41
    %s103 = ssub.s32 %s16, %s37
    %s104 = sor.u32 %s102, %s103
    %s105 = ssub.s32 %s17, %s33
    %s106 = sor.u32 %s104, %s105
    %p107 = scmp.eq.s32.totalorder %s106, 0
    %s109 = sadd.s32 %s108, 1
    %s110 = scalar_select %p107, %s108, %s109
    %p113 = pneg %p107
    %p114 = scmp.eq.s32.totalorder %s8, 2
    %p115 = por %p113, %p114
    %p116 = scmp.ne.s32.totalorder %s108, %s111
    %p117 = scmp.eq.s32.totalorder %s8, 0
    %p118 = por %p116, %p117
    %p119 = scmp.ne.s32.totalorder %s108, %s111
    %p120 = scmp.eq.s32.totalorder %s13, 2
    %p121 = por %p119, %p120
    %p122 = scmp.ne.s32.totalorder %s111, %s112
    %p123 = scmp.eq.s32.totalorder %s13, 0
    %p124 = por %p122, %p123
    %p125 = scmp.ne.s32.totalorder %s111, %s112
    %p126 = scmp.eq.s32.totalorder %s14, 2
    %p127 = por %p125, %p126
    %p129 = scmp.ne.s32.totalorder %s112, %s128
    %p130 = scmp.eq.s32.totalorder %s14, 0
    %p131 = por %p129, %p130
    %p132 = scmp.le.s32.totalorder 1, %s8
    %p133 = scmp.lt.s32.totalorder %s8, 4
    %p134 = pnand %p132, %p133
    %p135 = pneg %p134
    // Predicated region
    $region9: #{multi_head_attention.3} parent=5 // pred_check
      _
    $region10: #{multi_head_attention.3} parent=5 // pred_check_branch
      %137 = sbr.rel (%p134) target = $region12
    $region11: #{multi_head_attention.3} parent=5 // pred_region
      %s138 = ssub.s32 %s8, 1
    $region12: #{multi_head_attention.3} parent=5 // pred_fallthru
      _
    %p139 = scmp.lt.s32.totalorder %s8, 3
    // Predicated region
    $region13: #{multi_head_attention.3} parent=5 // pred_check
      %p140 = pneg %p139
    $region14: #{multi_head_attention.3} parent=5 // pred_check_branch
      %142 = sbr.rel (%p140) target = $region16
    $region15: #{multi_head_attention.3} parent=5 // pred_region
      // Predicated region
      $region17: #{multi_head_attention.3} parent=15 // pred_check
        %p143 = pneg %p58
      $region18: #{multi_head_attention.3} parent=15 // pred_check_branch
        %145 = sbr.rel (%p143) target = $region20
      $region19: #{multi_head_attention.3} parent=15 // pred_region
        %s146 = smul.u32 2, %s16
        %p147 = scmp.lt.s32.totalorder %s15, 2
        %s148 = scalar_select %p147, %s15, 2
        %p149 = scmp.lt.s32.totalorder %s146, 1
        %s150 = scalar_select %p149, %s146, 1
        %p151 = scmp.lt.s32.totalorder %s18, 0
        %s152 = scalar_select %p151, %s18, 0
        %s153 = sadd.s32 %s152, %s150
        %s154 = smul.addr %s148, 2
        %s155 = sadd.s32 %s153, %s154
        %s156 = smul.addr %s155, 8
        %s157 = scalar_lea.vmem %s0, %s156
        %s158 = smul.u32 2, %s16
      $region20: #{multi_head_attention.3} parent=15 // pred_fallthru
        _
      // Predicated region
      $region21: #{multi_head_attention.3} parent=15 // pred_check
        %p159 = pneg %p88
      $region22: #{multi_head_attention.3} parent=15 // pred_check_branch
        %161 = sbr.rel (%p159) target = $region24
      $region23: #{multi_head_attention.3} parent=15 // pred_region
        %s162 = smul.u32 4, %s18
        %p163 = scmp.lt.s32.totalorder %s15, 2
        %s164 = scalar_select %p163, %s15, 2
        %p165 = scmp.lt.s32.totalorder %s162, 3
        %s166 = scalar_select %p165, %s162, 3
        %p167 = scmp.lt.s32.totalorder %s17, 0
        %s168 = scalar_select %p167, %s17, 0
        %s169 = sadd.s32 %s168, %s166
        %s170 = smul.addr %s164, 4
        %s171 = sadd.s32 %s169, %s170
        %s172 = smul.addr %s171, 8
        %s173 = scalar_lea.vmem %s1, %s172
        %s174 = smul.u32 4, %s18
      $region24: #{multi_head_attention.3} parent=15 // pred_fallthru
        _
    $region16: #{multi_head_attention.3} parent=5 // pred_fallthru
      _
    %p175 = scmp.le.s32.totalorder 1, %s8
    %p176 = scmp.lt.s32.totalorder %s8, 4
    %p177 = pnand %p175, %p176
    %p178 = pneg %p177
    // Predicated region
    $region25: #{multi_head_attention.3} parent=5 // pred_check
      _
    $region26: #{multi_head_attention.3} parent=5 // pred_check_branch
      %180 = sbr.rel (%p177) target = $region28
    $region27: #{multi_head_attention.3} parent=5 // pred_region
      %s181 = ssub.s32 %s8, 1
      %s182 = smul.u32 2, %s20
      %p183 = scmp.lt.s32.totalorder %s19, 2
      %s184 = scalar_select %p183, %s19, 2
      %p185 = scmp.lt.s32.totalorder %s182, 1
      %s186 = scalar_select %p185, %s182, 1
      %p187 = scmp.lt.s32.totalorder %s22, 0
      %s188 = scalar_select %p187, %s22, 0
      %s189 = sadd.s32 %s188, %s186
      %s190 = smul.addr %s184, 2
      %s191 = sadd.s32 %s189, %s190
      %s192 = smul.addr %s191, 8
      %s193 = scalar_lea.vmem %s0, %s192
      %p194 = pneg %p64
      %p195 = pneg %p61
      %s196 = smul.u32 4, %s22
      %p197 = scmp.lt.s32.totalorder %s19, 2
      %s198 = scalar_select %p197, %s19, 2
      %p199 = scmp.lt.s32.totalorder %s196, 3
      %s200 = scalar_select %p199, %s196, 3
      %p201 = scmp.lt.s32.totalorder %s21, 0
      %s202 = scalar_select %p201, %s21, 0
      %s203 = sadd.s32 %s202, %s200
      %s204 = smul.addr %s198, 4
      %s205 = sadd.s32 %s203, %s204
      %s206 = smul.addr %s205, 8
      %s207 = scalar_lea.vmem %s1, %s206
      %p208 = pneg %p94
      %p209 = pneg %p91
      %p210 = pneg %p124
      %p211 = pneg %p121
      %s212 = smul.u32 2, %s20
      %p213 = scmp.lt.s32.totalorder %s19, 2
      %s214 = scalar_select %p213, %s19, 2
      %p215 = scmp.lt.s32.totalorder %s212, 1
      %s216 = scalar_select %p215, %s212, 1
      %p217 = scmp.lt.s32.totalorder %s21, 0
      %s218 = scalar_select %p217, %s21, 0
      %s219 = sadd.s32 %s218, %s216
      %s220 = smul.addr %s214, 2
      %s221 = sadd.s32 %s219, %s220
      %s222 = smul.addr %s221, 8
      %s223 = scalar_lea.vmem %s2, %s222
      %s224 = smul.u32 2, %s20
      %p225 = scmp.lt.s32.totalorder %s19, 2
      %s226 = scalar_select %p225, %s19, 2
      %p227 = scmp.lt.s32.totalorder %s224, 1
      %s228 = scalar_select %p227, %s224, 1
      %p229 = scmp.lt.s32.totalorder %s22, 0
      %s230 = scalar_select %p229, %s22, 0
      %s231 = sadd.s32 %s230, %s228
      %s232 = smul.addr %s226, 2
      %s233 = sadd.s32 %s231, %s232
      %s234 = smul.addr %s233, 8
      %s235 = scalar_lea.vmem %s0, %s234
      %s236 = smul.u32 2, %s20
      %s237 = smul.u32 4, %s22
      %p238 = scmp.lt.s32.totalorder %s19, 2
      %s239 = scalar_select %p238, %s19, 2
      %p240 = scmp.lt.s32.totalorder %s237, 3
      %s241 = scalar_select %p240, %s237, 3
      %p242 = scmp.lt.s32.totalorder %s21, 0
      %s243 = scalar_select %p242, %s21, 0
      %s244 = sadd.s32 %s243, %s241
      %s245 = smul.addr %s239, 4
      %s246 = sadd.s32 %s244, %s245
      %s247 = smul.addr %s246, 8
      %s248 = scalar_lea.vmem %s1, %s247
      %s249 = smul.u32 4, %s22
      %s250 = smul.u32 2, %s20
      %p251 = scmp.lt.s32.totalorder %s19, 2
      %s252 = scalar_select %p251, %s19, 2
      %p253 = scmp.lt.s32.totalorder %s250, 1
      %s254 = scalar_select %p253, %s250, 1
      %p255 = scmp.lt.s32.totalorder %s21, 0
      %s256 = scalar_select %p255, %s21, 0
      %s257 = sadd.s32 %s256, %s254
      %s258 = smul.addr %s252, 2
      %s259 = sadd.s32 %s257, %s258
      %s260 = smul.addr %s259, 8
      %s261 = scalar_lea.vmem %s2, %s260
      %s262 = smul.u32 2, %s20
      %p264 = scmp.eq.s32.totalorder %s22, 0
      // Predicated region
      $region29: #{multi_head_attention.3} parent=27 // pred_check
        %p265 = pneg %p264
      $region30: #{multi_head_attention.3} parent=27 // pred_check_branch
        %267 = sbr.rel (%p265) target = $region32
      $region31: #{multi_head_attention.3} parent=27 // pred_region
        %vm268 = vcmask 261120
        %269 = vst.msk [vmem:[#allocation2] sm:$0xff] %vm268, 0.0
        %270 = vst.msk [vmem:[#allocation2 + $0x8] sm:$0xff] %vm268, 0.0
      $region32: #{multi_head_attention.3} parent=27 // pred_fallthru
        _
      %v271 = vld [vmem:[#allocation2] sm:$0xff]
      %v272 = vld [vmem:[#allocation2 + $0x8] sm:$0xff]
      %v273 = vld [vmem:[%s235] sm:$0xff]
      %v274 = vld [vmem:[%s235 + $0x8] sm:$0xff]
      %v275 = vpack.c.bf16 %v274, %v273
      %v276 = vld [vmem:[%s248] sm:$0xff]
      %v277 = vld [vmem:[%s248 + $0x8] sm:$0xff]
      %v278 = vld [vmem:[%s248 + $0x10] sm:$0xff]
      %v279 = vld [vmem:[%s248 + $0x18] sm:$0xff]
      %v280 = vpack.c.bf16 %v277, %v276
      %v281 = vpack.c.bf16 %v279, %v278
      %vm282 = vcmask 261120
      %v284 = vsel %vm282, %v275, 0
      %286 = vmatprep.subr.bf16.mxu0 0
      %287 = vmatpush1.bf16.msra.mxu0 0
      %288 = vmatprep.subr.bf16.mxu0 0
      %289 = vmatpush1.bf16.msra.mxu0 0
      %290 = vmatprep.subr.bf16.mxu0 0
      %291 = vmatpush1.bf16.msra.mxu0 0
      %292 = vmatprep.subr.bf16.mxu0 0
      %293 = vmatpush1.bf16.msra.mxu0 0
      %294 = vmatprep.subr.bf16.mxu0 0
      %295 = vmatpush1.bf16.msra.mxu0 0
      %296 = vmatprep.subr.bf16.mxu0 0
      %297 = vmatpush1.bf16.msra.mxu0 0
      %298 = vmatprep.subr.bf16.mxu0 0
      %299 = vmatpush1.bf16.msra.mxu0 %v281
      %300 = vmatprep.subr.bf16.mxu0 0
      %301 = vmatpush1.bf16.msra.mxu0 %v280
      %302 = vmatprep.subr.bf16.mxu0 0
      %303 = vmatpush2.bf16.msra.mxu0 0
      %304 = vmatprep.subr.bf16.mxu0 0
      %305 = vmatpush2.bf16.msra.mxu0 0
      %306 = vmatprep.subr.bf16.mxu0 0
      %307 = vmatpush2.bf16.msra.mxu0 0
      %308 = vmatprep.subr.bf16.mxu0 0
      %309 = vmatpush2.bf16.msra.mxu0 0
      %310 = vmatprep.subr.bf16.mxu0 0
      %311 = vmatpush2.bf16.msra.mxu0 0
      %312 = vmatprep.subr.bf16.mxu0 0
      %313 = vmatpush2.bf16.msra.mxu0 0
      %314 = vmatprep.subr.bf16.mxu0 0
      %315 = vmatpush2.bf16.msra.mxu0 0
      %316 = vmatprep.subr.bf16.mxu0 0
      %317 = vmatpush2.bf16.msra.mxu0 0
      %318 = vmatprep.mubr.bf16.mxu0 0
      %319 = vmatmul.mubr.bf16.gmra.mxu0 %v284
      %v320 = vpop.f32.mrf.mxu0
      %v321 = vadd.f32 0.0, %v320
      %v322 = vpop.f32.mrf.mxu0
      %v323 = vpop.f32.mrf.mxu0
      %v324 = vadd.f32 0.0, %v323
      %v325 = vpop.f32.mrf.mxu0
      %326 = vdwg.mxu0
      %v327 = vadd.f32 %v271, %v321
      %v328 = vadd.f32 %v272, %v324
      %329 = vst.msk [vmem:[#allocation2] sm:$0xff] %vm282, %v327
      %330 = vst.msk [vmem:[#allocation2 + $0x8] sm:$0xff] %vm282, %v328
      // Predicated region
      $region33: #{multi_head_attention.3} parent=27 // pred_check
        %p331 = pneg %p264
      $region34: #{multi_head_attention.3} parent=27 // pred_check_branch
        %333 = sbr.rel (%p331) target = $region36
      $region35: #{multi_head_attention.3} parent=27 // pred_region
        %v334 = vld [vmem:[#allocation2] sm:$0xff]
        %v335 = vld [vmem:[#allocation2 + $0x8] sm:$0xff]
        %336 = vst.msk [vmem:[%s261] sm:$0xff] %vm282, %v334
        %337 = vst.msk [vmem:[%s261 + $0x8] sm:$0xff] %vm282, %v335
      $region36: #{multi_head_attention.3} parent=27 // pred_fallthru
        _
      %s338 = smul.u32 2, %s20
      %p339 = scmp.lt.s32.totalorder %s19, 2
      %s340 = scalar_select %p339, %s19, 2
      %p341 = scmp.lt.s32.totalorder %s338, 1
      %s342 = scalar_select %p341, %s338, 1
      %p343 = scmp.lt.s32.totalorder %s21, 0
      %s344 = scalar_select %p343, %s21, 0
      %s345 = sadd.s32 %s344, %s342
      %s346 = smul.addr %s340, 2
      %s347 = sadd.s32 %s345, %s346
      %s348 = smul.addr %s347, 8
      %s349 = scalar_lea.vmem %s2, %s348
      // Predicated region
      $region37: #{multi_head_attention.3} parent=27 // pred_check
        %p350 = pneg %p121
      $region38: #{multi_head_attention.3} parent=27 // pred_check_branch
        %352 = sbr.rel (%p350) target = $region40
      $region39: #{multi_head_attention.3} parent=27 // pred_region
        %s353 = smul.u32 2, %s20
      $region40: #{multi_head_attention.3} parent=27 // pred_fallthru
        _
    $region28: #{multi_head_attention.3} parent=5 // pred_fallthru
      _
    %p354 = scmp.le.s32.totalorder 2, %s8
    // Predicated region
    $region41: #{multi_head_attention.3} parent=5 // pred_check
      %p355 = pneg %p354
    $region42: #{multi_head_attention.3} parent=5 // pred_check_branch
      %357 = sbr.rel (%p355) target = $region44
    $region43: #{multi_head_attention.3} parent=5 // pred_region
      %s358 = ssub.s32 %s8, 2
      // Predicated region
      $region45: #{multi_head_attention.3} parent=43 // pred_check
        %p359 = pneg %p127
      $region46: #{multi_head_attention.3} parent=43 // pred_check_branch
        %361 = sbr.rel (%p359) target = $region48
      $region47: #{multi_head_attention.3} parent=43 // pred_region
        %s362 = smul.u32 2, %s24
        %p363 = scmp.lt.s32.totalorder %s23, 2
        %s364 = scalar_select %p363, %s23, 2
        %p365 = scmp.lt.s32.totalorder %s362, 1
        %s366 = scalar_select %p365, %s362, 1
        %p367 = scmp.lt.s32.totalorder %s25, 0
        %s368 = scalar_select %p367, %s25, 0
        %s369 = sadd.s32 %s368, %s366
        %s370 = smul.addr %s364, 2
        %s371 = sadd.s32 %s369, %s370
        %s372 = smul.addr %s371, 8
        %s373 = scalar_lea.vmem %s2, %s372
      $region48: #{multi_head_attention.3} parent=43 // pred_fallthru
        _
    $region44: #{multi_head_attention.3} parent=5 // pred_fallthru
      _
  $region6: #{multi_head_attention.3} parent=0 // loop_footer
    %s12 = sadd.s32 1, %s8
  $region7: #{multi_head_attention.3} parent=0 // loop_footer_branch
    %7 = sbr.rel target = $region3
  $region8: #{multi_head_attention.3} parent=0 // loop_exit
    _

// kernel: multi_head_attention.4
$region0: #{multi_head_attention.4}
  #allocation0 [shape = 'u32[]', space=smem, size = 0x4, offset = 0x4, fixed_abs, tag = 'smem constant byte address 0x4 - core index']
  #allocation1 [shape = 'u32[144,128]{1,0:T(1,128)}', space=vmem, size = 0x12000, scoped, tag = 'internal scratch']
  #allocation2 [shape = 'bf16[8,32]{1,0:T(8,128)(2,1)}', space=vmem, size = 0x800, scoped, tag = 'scratch operand']
  #allocation3 [shape = 'f32[8,4]{1,0:T(8,128)}', space=vmem, size = 0x1000, scoped, tag = 'scratch operand']
  #allocation4 [shape = 'f32[8,4]{1,0:T(8,128)}', space=vmem, size = 0x1000, scoped, tag = 'scratch operand']
  #allocation5 [shape = 'f32[8,32]{1,0:T(8,128)}', space=vmem, size = 0x1000, scoped, tag = 'scratch operand']
  %s0 = inlined_call_operand.vmem [shape: f32[2,8,32], index: 0, kind: input, shape index: {}]
  %s1 = inlined_call_operand.vmem [shape: f32[2,8,32], index: 1, kind: input, shape index: {}]
  %s2 = inlined_call_operand.vmem [shape: f32[2,8,32], index: 2, kind: input, shape index: {}]
  %s3 = inlined_call_operand.vmem [shape: s8[2,8,8], index: 3, kind: input, shape index: {}]
  %s4 = inlined_call_operand.vmem [shape: f32[2,8,32], index: 4, kind: output, shape index: {}]
  %s5 = sld [smem:[#allocation0]]
  $region57: #{multi_head_attention.4} parent=0
    _
  %s7 = ssub.s32 1, %s5
  %s8 = scalar_select 0, %s7, %s5
  loop: start=0, step=1, limit=4
  $region2: #{multi_head_attention.4} parent=0 // loop_pre_header
    _
  $region3: #{multi_head_attention.4} parent=0 // loop_header
    %s10 = sphi 0, %s14
    %p11 = scmp.ge.s32.totalorder %s10, 4
    %s17 = sphi 0, %s36
    %s18 = sphi 0, %s32
    %s19 = sphi 0, %s28
    %s20 = sphi 0, %s17
    %s21 = sphi 0, %s18
    %s22 = sphi 0, %s19
    %s23 = sphi 0, %s20
    %s24 = sphi 0, %s21
    %s25 = sphi 0, %s22
    %s41 = sphi 0, %s43
    %s44 = sphi 0, %s41
    %s45 = sphi 0, %s44
    %s61 = sphi 0, %s45
    %s69 = sphi 0, %s71
    %s72 = sphi 0, %s69
    %s73 = sphi 0, %s72
    %s89 = sphi 0, %s73
    %s97 = sphi 0, %s99
    %s100 = sphi 0, %s97
    %s101 = sphi 0, %s100
    %s117 = sphi 0, %s101
    %s127 = sphi 0, %s129
    %s130 = sphi 0, %s127
    %s131 = sphi 0, %s130
    %s147 = sphi 0, %s131
    %s155 = sphi 0, %s157
    %s158 = sphi 0, %s155
    %s159 = sphi 0, %s158
    %s175 = sphi 0, %s159
  $region4: #{multi_head_attention.4} parent=0 // loop_header_branch
    %13 = sbr.rel (%p11) target = $region8
  $region5: #{multi_head_attention.4} parent=0 // loop_body
    %s15 = ssub.s32 %s10, 1
    %s16 = ssub.s32 %s10, 2
    %s26 = sadd.s32 1, %s19
    %p27 = scmp.ge.s32.totalorder %s26, 1
    %s28 = scalar_select %p27, 0, %s26
    %s29 = sadd.s32 1, %s18
    %s30 = scalar_select %p27, %s29, %s18
    %p31 = scmp.ge.s32.totalorder %s30, 1
    %s32 = scalar_select %p31, 0, %s30
    %s33 = sadd.s32 1, %s17
    %s34 = scalar_select %p31, %s33, %s17
    %p35 = scmp.ge.s32.totalorder %s34, 2
    %s36 = scalar_select %p35, 0, %s34
    %s37 = ssub.s32 %s17, %s36
    %s38 = ssub.s32 %s18, %s32
    %s39 = sor.u32 %s37, %s38
    %p40 = scmp.eq.s32.totalorder %s39, 0
    %s42 = sadd.s32 %s41, 1
    %s43 = scalar_select %p40, %s41, %s42
    %p46 = pneg %p40
    %p47 = scmp.eq.s32.totalorder %s10, 1
    %p48 = por %p46, %p47
    %p49 = scmp.ne.s32.totalorder %s41, %s44
    %p50 = scmp.eq.s32.totalorder %s10, 0
    %p51 = por %p49, %p50
    %p52 = scmp.ne.s32.totalorder %s41, %s44
    %p53 = scmp.eq.s32.totalorder %s15, 1
    %p54 = por %p52, %p53
    %p55 = scmp.ne.s32.totalorder %s44, %s45
    %p56 = scmp.eq.s32.totalorder %s15, 0
    %p57 = por %p55, %p56
    %p58 = scmp.ne.s32.totalorder %s44, %s45
    %p59 = scmp.eq.s32.totalorder %s16, 1
    %p60 = por %p58, %p59
    %p62 = scmp.ne.s32.totalorder %s45, %s61
    %p63 = scmp.eq.s32.totalorder %s16, 0
    %p64 = por %p62, %p63
    %s65 = ssub.s32 %s17, %s36
    %s66 = ssub.s32 %s19, %s28
    %s67 = sor.u32 %s65, %s66
    %p68 = scmp.eq.s32.totalorder %s67, 0
    %s70 = sadd.s32 %s69, 1
    %s71 = scalar_select %p68, %s69, %s70
    %p74 = pneg %p68
    %p75 = scmp.eq.s32.totalorder %s10, 1
    %p76 = por %p74, %p75
    %p77 = scmp.ne.s32.totalorder %s69, %s72
    %p78 = scmp.eq.s32.totalorder %s10, 0
    %p79 = por %p77, %p78
    %p80 = scmp.ne.s32.totalorder %s69, %s72
    %p81 = scmp.eq.s32.totalorder %s15, 1
    %p82 = por %p80, %p81
    %p83 = scmp.ne.s32.totalorder %s72, %s73
    %p84 = scmp.eq.s32.totalorder %s15, 0
    %p85 = por %p83, %p84
    %p86 = scmp.ne.s32.totalorder %s72, %s73
    %p87 = scmp.eq.s32.totalorder %s16, 1
    %p88 = por %p86, %p87
    %p90 = scmp.ne.s32.totalorder %s73, %s89
    %p91 = scmp.eq.s32.totalorder %s16, 0
    %p92 = por %p90, %p91
    %s93 = ssub.s32 %s17, %s36
    %s94 = ssub.s32 %s19, %s28
    %s95 = sor.u32 %s93, %s94
    %p96 = scmp.eq.s32.totalorder %s95, 0
    %s98 = sadd.s32 %s97, 1
    %s99 = scalar_select %p96, %s97, %s98
    %p102 = pneg %p96
    %p103 = scmp.eq.s32.totalorder %s10, 1
    %p104 = por %p102, %p103
    %p105 = scmp.ne.s32.totalorder %s97, %s100
    %p106 = scmp.eq.s32.totalorder %s10, 0
    %p107 = por %p105, %p106
    %p108 = scmp.ne.s32.totalorder %s97, %s100
    %p109 = scmp.eq.s32.totalorder %s15, 1
    %p110 = por %p108, %p109
    %p111 = scmp.ne.s32.totalorder %s100, %s101
    %p112 = scmp.eq.s32.totalorder %s15, 0
    %p113 = por %p111, %p112
    %p114 = scmp.ne.s32.totalorder %s100, %s101
    %p115 = scmp.eq.s32.totalorder %s16, 1
    %p116 = por %p114, %p115
    %p118 = scmp.ne.s32.totalorder %s101, %s117
    %p119 = scmp.eq.s32.totalorder %s16, 0
    %p120 = por %p118, %p119
    %s121 = ssub.s32 %s17, %s36
    %s122 = ssub.s32 %s18, %s32
    %s123 = sor.u32 %s121, %s122
    %s124 = ssub.s32 %s19, %s28
    %s125 = sor.u32 %s123, %s124
    %p126 = scmp.eq.s32.totalorder %s125, 0
    %s128 = sadd.s32 %s127, 1
    %s129 = scalar_select %p126, %s127, %s128
    %p132 = pneg %p126
    %p133 = scmp.eq.s32.totalorder %s10, 1
    %p134 = por %p132, %p133
    %p135 = scmp.ne.s32.totalorder %s127, %s130
    %p136 = scmp.eq.s32.totalorder %s10, 0
    %p137 = por %p135, %p136
    %p138 = scmp.ne.s32.totalorder %s127, %s130
    %p139 = scmp.eq.s32.totalorder %s15, 1
    %p140 = por %p138, %p139
    %p141 = scmp.ne.s32.totalorder %s130, %s131
    %p142 = scmp.eq.s32.totalorder %s15, 0
    %p143 = por %p141, %p142
    %p144 = scmp.ne.s32.totalorder %s130, %s131
    %p145 = scmp.eq.s32.totalorder %s16, 1
    %p146 = por %p144, %p145
    %p148 = scmp.ne.s32.totalorder %s131, %s147
    %p149 = scmp.eq.s32.totalorder %s16, 0
    %p150 = por %p148, %p149
    %s151 = ssub.s32 %s17, %s36
    %s152 = ssub.s32 %s18, %s32
    %s153 = sor.u32 %s151, %s152
    %p154 = scmp.eq.s32.totalorder %s153, 0
    %s156 = sadd.s32 %s155, 1
    %s157 = scalar_select %p154, %s155, %s156
    %p160 = pneg %p154
    %p161 = scmp.eq.s32.totalorder %s10, 1
    %p162 = por %p160, %p161
    %p163 = scmp.ne.s32.totalorder %s155, %s158
    %p164 = scmp.eq.s32.totalorder %s10, 0
    %p165 = por %p163, %p164
    %p166 = scmp.ne.s32.totalorder %s155, %s158
    %p167 = scmp.eq.s32.totalorder %s15, 1
    %p168 = por %p166, %p167
    %p169 = scmp.ne.s32.totalorder %s158, %s159
    %p170 = scmp.eq.s32.totalorder %s15, 0
    %p171 = por %p169, %p170
    %p172 = scmp.ne.s32.totalorder %s158, %s159
    %p173 = scmp.eq.s32.totalorder %s16, 1
    %p174 = por %p172, %p173
    %p176 = scmp.ne.s32.totalorder %s159, %s175
    %p177 = scmp.eq.s32.totalorder %s16, 0
    %p178 = por %p176, %p177
    %p179 = scmp.le.s32.totalorder 1, %s10
    %p180 = scmp.lt.s32.totalorder %s10, 3
    %p181 = pnand %p179, %p180
    %p182 = pneg %p181
    // Predicated region
    $region9: #{multi_head_attention.4} parent=5 // pred_check
      _
    $region10: #{multi_head_attention.4} parent=5 // pred_check_branch
      %184 = sbr.rel (%p181) target = $region12
    $region11: #{multi_head_attention.4} parent=5 // pred_region
      %s185 = ssub.s32 %s10, 1
    $region12: #{multi_head_attention.4} parent=5 // pred_fallthru
      _
    %p186 = scmp.lt.s32.totalorder %s10, 2
    // Predicated region
    $region13: #{multi_head_attention.4} parent=5 // pred_check
      %p187 = pneg %p186
    $region14: #{multi_head_attention.4} parent=5 // pred_check_branch
      %189 = sbr.rel (%p187) target = $region16
    $region15: #{multi_head_attention.4} parent=5 // pred_region
      // Predicated region
      $region17: #{multi_head_attention.4} parent=15 // pred_check
        %p190 = pneg %p51
      $region18: #{multi_head_attention.4} parent=15 // pred_check_branch
        %192 = sbr.rel (%p190) target = $region20
      $region19: #{multi_head_attention.4} parent=15 // pred_region
        %p193 = scmp.lt.s32.totalorder %s17, 1
        %s194 = scalar_select %p193, %s17, 1
        %p195 = scmp.lt.s32.totalorder %s18, 0
        %s196 = scalar_select %p195, %s18, 0
        %s197 = sadd.s32 %s196, %s194
        %s198 = smul.addr %s197, 8
        %s199 = scalar_lea.vmem %s0, %s198
      $region20: #{multi_head_attention.4} parent=15 // pred_fallthru
        _
      // Predicated region
      $region21: #{multi_head_attention.4} parent=15 // pred_check
        %p200 = pneg %p79
      $region22: #{multi_head_attention.4} parent=15 // pred_check_branch
        %202 = sbr.rel (%p200) target = $region24
      $region23: #{multi_head_attention.4} parent=15 // pred_region
        %p203 = scmp.lt.s32.totalorder %s17, 1
        %s204 = scalar_select %p203, %s17, 1
        %p205 = scmp.lt.s32.totalorder %s19, 0
        %s206 = scalar_select %p205, %s19, 0
        %s207 = sadd.s32 %s206, %s204
        %s208 = smul.addr %s207, 8
        %s209 = scalar_lea.vmem %s1, %s208
      $region24: #{multi_head_attention.4} parent=15 // pred_fallthru
        _
      // Predicated region
      $region25: #{multi_head_attention.4} parent=15 // pred_check
        %p210 = pneg %p107
      $region26: #{multi_head_attention.4} parent=15 // pred_check_branch
        %212 = sbr.rel (%p210) target = $region28
      $region27: #{multi_head_attention.4} parent=15 // pred_region
        %p213 = scmp.lt.s32.totalorder %s17, 1
        %s214 = scalar_select %p213, %s17, 1
        %p215 = scmp.lt.s32.totalorder %s19, 0
        %s216 = scalar_select %p215, %s19, 0
        %s217 = sadd.s32 %s216, %s214
        %s218 = smul.addr %s217, 8
        %s219 = scalar_lea.vmem %s2, %s218
      $region28: #{multi_head_attention.4} parent=15 // pred_fallthru
        _
      // Predicated region
      $region29: #{multi_head_attention.4} parent=15 // pred_check
        %p220 = pneg %p137
      $region30: #{multi_head_attention.4} parent=15 // pred_check_branch
        %222 = sbr.rel (%p220) target = $region32
      $region31: #{multi_head_attention.4} parent=15 // pred_region
        %p223 = scmp.lt.s32.totalorder %s17, 1
        %s224 = scalar_select %p223, %s17, 1
        %p225 = scmp.lt.s32.totalorder %s18, 0
        %s226 = scalar_select %p225, %s18, 0
        %p227 = scmp.lt.s32.totalorder %s19, 0
        %s228 = scalar_select %p227, %s19, 0
        %s229 = sadd.s32 %s228, %s226
        %s230 = sadd.s32 %s229, %s224
        %s231 = smul.addr %s230, 2
        %s232 = scalar_lea.vmem %s3, %s231
      $region32: #{multi_head_attention.4} parent=15 // pred_fallthru
        _
    $region16: #{multi_head_attention.4} parent=5 // pred_fallthru
      _
    %p233 = scmp.le.s32.totalorder 1, %s10
    %p234 = scmp.lt.s32.totalorder %s10, 3
    %p235 = pnand %p233, %p234
    %p236 = pneg %p235
    // Predicated region
    $region33: #{multi_head_attention.4} parent=5 // pred_check
      _
    $region34: #{multi_head_attention.4} parent=5 // pred_check_branch
      %238 = sbr.rel (%p235) target = $region36
    $region35: #{multi_head_attention.4} parent=5 // pred_region
      %s239 = ssub.s32 %s10, 1
      %p240 = scmp.lt.s32.totalorder %s20, 1
      %s241 = scalar_select %p240, %s20, 1
      %p242 = scmp.lt.s32.totalorder %s21, 0
      %s243 = scalar_select %p242, %s21, 0
      %s244 = sadd.s32 %s243, %s241
      %s245 = smul.addr %s244, 8
      %s246 = scalar_lea.vmem %s0, %s245
      %p247 = pneg %p57
      %p248 = pneg %p54
      %p249 = scmp.lt.s32.totalorder %s20, 1
      %s250 = scalar_select %p249, %s20, 1
      %p251 = scmp.lt.s32.totalorder %s22, 0
      %s252 = scalar_select %p251, %s22, 0
      %s253 = sadd.s32 %s252, %s250
      %s254 = smul.addr %s253, 8
      %s255 = scalar_lea.vmem %s1, %s254
      %p256 = pneg %p85
      %p257 = pneg %p82
      %p258 = scmp.lt.s32.totalorder %s20, 1
      %s259 = scalar_select %p258, %s20, 1
      %p260 = scmp.lt.s32.totalorder %s22, 0
      %s261 = scalar_select %p260, %s22, 0
      %s262 = sadd.s32 %s261, %s259
      %s263 = smul.addr %s262, 8
      %s264 = scalar_lea.vmem %s2, %s263
      %p265 = pneg %p113
      %p266 = pneg %p110
      %p267 = scmp.lt.s32.totalorder %s20, 1
      %s268 = scalar_select %p267, %s20, 1
      %p269 = scmp.lt.s32.totalorder %s21, 0
      %s270 = scalar_select %p269, %s21, 0
      %p271 = scmp.lt.s32.totalorder %s22, 0
      %s272 = scalar_select %p271, %s22, 0
      %s273 = sadd.s32 %s272, %s270
      %s274 = sadd.s32 %s273, %s268
      %s275 = smul.addr %s274, 2
      %s276 = scalar_lea.vmem %s3, %s275
      %p277 = pneg %p143
      %p278 = pneg %p140
      %p279 = pneg %p171
      %p280 = pneg %p168
      %p281 = scmp.lt.s32.totalorder %s20, 1
      %s282 = scalar_select %p281, %s20, 1
      %p283 = scmp.lt.s32.totalorder %s21, 0
      %s284 = scalar_select %p283, %s21, 0
      %s285 = sadd.s32 %s284, %s282
      %s286 = smul.addr %s285, 8
      %s287 = scalar_lea.vmem %s4, %s286
      %p288 = scmp.lt.s32.totalorder %s20, 1
      %s289 = scalar_select %p288, %s20, 1
      %p290 = scmp.lt.s32.totalorder %s21, 0
      %s291 = scalar_select %p290, %s21, 0
      %s292 = sadd.s32 %s291, %s289
      %s293 = smul.addr %s292, 8
      %s294 = scalar_lea.vmem %s0, %s293
      %p295 = scmp.lt.s32.totalorder %s20, 1
      %s296 = scalar_select %p295, %s20, 1
      %p297 = scmp.lt.s32.totalorder %s22, 0
      %s298 = scalar_select %p297, %s22, 0
      %s299 = sadd.s32 %s298, %s296
      %s300 = smul.addr %s299, 8
      %s301 = scalar_lea.vmem %s1, %s300
      %p302 = scmp.lt.s32.totalorder %s20, 1
      %s303 = scalar_select %p302, %s20, 1
      %p304 = scmp.lt.s32.totalorder %s22, 0
      %s305 = scalar_select %p304, %s22, 0
      %s306 = sadd.s32 %s305, %s303
      %s307 = smul.addr %s306, 8
      %s308 = scalar_lea.vmem %s2, %s307
      %p309 = scmp.lt.s32.totalorder %s20, 1
      %s310 = scalar_select %p309, %s20, 1
      %p311 = scmp.lt.s32.totalorder %s21, 0
      %s312 = scalar_select %p311, %s21, 0
      %p313 = scmp.lt.s32.totalorder %s22, 0
      %s314 = scalar_select %p313, %s22, 0
      %s315 = sadd.s32 %s314, %s312
      %s316 = sadd.s32 %s315, %s310
      %s317 = smul.addr %s316, 2
      %s318 = scalar_lea.vmem %s3, %s317
      %p319 = scmp.lt.s32.totalorder %s20, 1
      %s320 = scalar_select %p319, %s20, 1
      %p321 = scmp.lt.s32.totalorder %s21, 0
      %s322 = scalar_select %p321, %s21, 0
      %s323 = sadd.s32 %s322, %s320
      %s324 = smul.addr %s323, 8
      %s325 = scalar_lea.vmem %s4, %s324
      %p329 = scmp.eq.s32.totalorder %s22, 0
      // Predicated region
      $region37: #{multi_head_attention.4} parent=35 // pred_check
        %p330 = pneg %p329
      $region38: #{multi_head_attention.4} parent=35 // pred_check_branch
        %332 = sbr.rel (%p330) target = $region40
      $region39: #{multi_head_attention.4} parent=35 // pred_region
        %v333 = vld [vmem:[%s294] sm:$0xff]
        %v334 = vmul.f32 %v333, 0.70710677
        %v335 = vpack.c.bf16 %v334, %v334
        %vm336 = vcmask 257024
        %337 = vst.msk [vmem:[#allocation2] sm:$0xf] %vm336, %v335
        %vm338 = vcmask 31744
        %339 = vst.msk [vmem:[#allocation3] sm:$0xff] %vm338, -inf
        %340 = vst.msk [vmem:[#allocation4] sm:$0xff] %vm338, 0.0
        %vm341 = vcmask 261120
        %342 = vst.msk [vmem:[#allocation5] sm:$0xff] %vm341, 0.0
      $region40: #{multi_head_attention.4} parent=35 // pred_fallthru
        _
      %v343 = vld [vmem:[%s301] sm:$0xff]
      %v344 = vpack.c.bf16 %v343, %v343
      %v345 = vld [vmem:[%s308] sm:$0xff]
      %v346 = vpack.c.bf16 %v345, %v345
      %v347 = vld [vmem:[%s318] sm:$0x3]
      %vm348 = vnez %v347
      %v349 = vld [vmem:[#allocation2] sm:$0xf]
      %vm350 = vcmask 64512
      %v352 = vsel %vm350, %v349, 0
      %v355 = vsel %vm350, %v344, 0
      %357 = vmatprep.subr.bf16.mxu0 0
      %358 = vmatpush1.bf16.xpose.msra.mxu0 0
      %359 = vmatprep.subr.bf16.mxu0 0
      %360 = vmatpush1.bf16.xpose.msra.mxu0 0
      %361 = vmatprep.subr.bf16.mxu0 0
      %362 = vmatpush1.bf16.xpose.msra.mxu0 0
      %363 = vmatprep.subr.bf16.mxu0 0
      %364 = vmatpush1.bf16.xpose.msra.mxu0 0
      %365 = vmatprep.subr.bf16.mxu0 0
      %366 = vmatpush1.bf16.xpose.msra.mxu0 0
      %367 = vmatprep.subr.bf16.mxu0 0
      %368 = vmatpush1.bf16.xpose.msra.mxu0 0
      %369 = vmatprep.subr.bf16.mxu0 0
      %370 = vmatpush1.bf16.xpose.msra.mxu0 0
      %371 = vmatprep.subr.bf16.mxu0 0
      %372 = vmatpush1.bf16.xpose.msra.mxu0 %v355
      %373 = vmatprep.subr.bf16.mxu0 0
      %374 = vmatpush2.bf16.xpose.msra.mxu0 0
      %375 = vmatprep.subr.bf16.mxu0 0
      %376 = vmatpush2.bf16.xpose.msra.mxu0 0
      %377 = vmatprep.subr.bf16.mxu0 0
      %378 = vmatpush2.bf16.xpose.msra.mxu0 0
      %379 = vmatprep.subr.bf16.mxu0 0
      %380 = vmatpush2.bf16.xpose.msra.mxu0 0
      %381 = vmatprep.subr.bf16.mxu0 0
      %382 = vmatpush2.bf16.xpose.msra.mxu0 0
      %383 = vmatprep.subr.bf16.mxu0 0
      %384 = vmatpush2.bf16.xpose.msra.mxu0 0
      %385 = vmatprep.subr.bf16.mxu0 0
      %386 = vmatpush2.bf16.xpose.msra.mxu0 0
      %387 = vmatprep.subr.bf16.mxu0 0
      %388 = vmatpush2.bf16.xpose.msra.mxu0 0
      %389 = vmatprep.mubr.bf16.mxu0 0
      %390 = vmatmul.mubr.bf16.gmra.mxu0 %v352
      %v391 = vpop.f32.mrf.mxu0
      %v392 = vadd.f32 0.0, %v391
      %v393 = vpop.f32.mrf.mxu0
      %v394 = vpop.f32.mrf.mxu0
      %v395 = vpop.f32.mrf.mxu0
      %396 = vdwg.mxu0
      %v397 = vsel %vm348, 16843009, 0
      %v398 = vunpack.c.0.s8 %v397
      %vm399 = vcmp.ne.s32.totalorder %v398, 0
      %v400 = vsel %vm399, -1e+09, %v392
      %v401 = vld [vmem:[#allocation3] sm:$0xff]
      %v402 = vsel %vm350, %v400, -inf
      %403 = vmax.xlane.f32.xlu0 %v402
      %v404 = vpop.xlane.xlu0 %403
      %v405 = vmax.f32 %v401, %v404
      %v406 = vsub.f32 %v401, %v405
      %v407 = vmul.f32 %v406, 1.442695
      %v408 = vpow.pop %v407
      %410 = vset.pattern.permute.xlu0 0
      %411 = vperm.xlu0 %410, %v405
      %v412 = vpop.permute.xlu0 %411
      %v414 = vsub.f32 %v400, %v412
      %v415 = vmul.f32 %v414, 1.442695
      %v416 = vpow.pop %v415
      %v417 = vld [vmem:[#allocation4] sm:$0xff]
      %v418 = vmul.f32 %v408, %v417
      %v419 = vsel %vm350, %v416, 0.0
      %420 = vadd.xlane.f32.xlu0 %v419
      %v421 = vpop.xlane.xlu0 %420
      %v422 = vadd.f32 %v418, %v421
      %vm423 = vcmask 7168
      %424 = vst.msk [vmem:[#allocation4] sm:$0xff] %vm423, %v422
      %v425 = vpack.c.bf16 %v416, %v416
      %v427 = vsel %vm350, %v425, 0
      %vm429 = vcmask 1043456
      %v431 = vsel %vm429, %v346, 0
      %433 = vmatprep.subr.bf16.mxu0 0
      %434 = vmatpush1.bf16.msra.mxu0 0
      %435 = vmatprep.subr.bf16.mxu0 0
      %436 = vmatpush1.bf16.msra.mxu0 0
      %437 = vmatprep.subr.bf16.mxu0 0
      %438 = vmatpush1.bf16.msra.mxu0 0
      %439 = vmatprep.subr.bf16.mxu0 0
      %440 = vmatpush1.bf16.msra.mxu0 0
      %441 = vmatprep.subr.bf16.mxu0 0
      %442 = vmatpush1.bf16.msra.mxu0 0
      %443 = vmatprep.subr.bf16.mxu0 0
      %444 = vmatpush1.bf16.msra.mxu0 0
      %445 = vmatprep.subr.bf16.mxu0 0
      %446 = vmatpush1.bf16.msra.mxu0 0
      %447 = vmatprep.subr.bf16.mxu0 0
      %448 = vmatpush1.bf16.msra.mxu0 %v431
      %449 = vmatprep.subr.bf16.mxu0 0
      %450 = vmatpush2.bf16.msra.mxu0 0
      %451 = vmatprep.subr.bf16.mxu0 0
      %452 = vmatpush2.bf16.msra.mxu0 0
      %453 = vmatprep.subr.bf16.mxu0 0
      %454 = vmatpush2.bf16.msra.mxu0 0
      %455 = vmatprep.subr.bf16.mxu0 0
      %456 = vmatpush2.bf16.msra.mxu0 0
      %457 = vmatprep.subr.bf16.mxu0 0
      %458 = vmatpush2.bf16.msra.mxu0 0
      %459 = vmatprep.subr.bf16.mxu0 0
      %460 = vmatpush2.bf16.msra.mxu0 0
      %461 = vmatprep.subr.bf16.mxu0 0
      %462 = vmatpush2.bf16.msra.mxu0 0
      %463 = vmatprep.subr.bf16.mxu0 0
      %464 = vmatpush2.bf16.msra.mxu0 0
      %465 = vmatprep.mubr.bf16.mxu0 0
      %466 = vmatmul.mubr.bf16.gmra.mxu0 %v427
      %v467 = vpop.f32.mrf.mxu0
      %v468 = vadd.f32 0.0, %v467
      %v469 = vpop.f32.mrf.mxu0
      %v470 = vpop.f32.mrf.mxu0
      %v471 = vpop.f32.mrf.mxu0
      %472 = vdwg.mxu0
      %v473 = vld [vmem:[#allocation5] sm:$0xff]
      %475 = vset.pattern.permute.xlu0 0
      %476 = vperm.xlu0 %475, %v408
      %v477 = vpop.permute.xlu0 %476
      %v479 = vmul.f32 %v477, %v473
      %v480 = vadd.f32 %v479, %v468
      %481 = vst.msk [vmem:[#allocation5] sm:$0xff] %vm350, %v480
      %482 = vst.msk [vmem:[#allocation3] sm:$0xff] %vm423, %v405
      %v483 = vld [vmem:[#allocation2] sm:$0xf]
      %v485 = vunpack.c.l.b16 %v483
      %v486 = vpack.c.b16 %v485, %v485
      %487 = vrot.lane.b32.xlu0 %v486, 120
      %v488 = vpop.permute.xlu0 %487
      %490 = vrot.lane.b32.xlu0 %v344, 120
      %v491 = vpop.permute.xlu0 %490
      %v493 = vsel %vm350, %v488, 0
      %v496 = vsel %vm350, %v491, 0
      %498 = vmatprep.subr.bf16.mxu0 0
      %499 = vmatpush1.bf16.xpose.msra.mxu0 0
      %500 = vmatprep.subr.bf16.mxu0 0
      %501 = vmatpush1.bf16.xpose.msra.mxu0 0
      %502 = vmatprep.subr.bf16.mxu0 0
      %503 = vmatpush1.bf16.xpose.msra.mxu0 0
      %504 = vmatprep.subr.bf16.mxu0 0
      %505 = vmatpush1.bf16.xpose.msra.mxu0 0
      %506 = vmatprep.subr.bf16.mxu0 0
      %507 = vmatpush1.bf16.xpose.msra.mxu0 0
      %508 = vmatprep.subr.bf16.mxu0 0
      %509 = vmatpush1.bf16.xpose.msra.mxu0 0
      %510 = vmatprep.subr.bf16.mxu0 0
      %511 = vmatpush1.bf16.xpose.msra.mxu0 0
      %512 = vmatprep.subr.bf16.mxu0 0
      %513 = vmatpush1.bf16.xpose.msra.mxu0 %v496
      %514 = vmatprep.subr.bf16.mxu0 0
      %515 = vmatpush2.bf16.xpose.msra.mxu0 0
      %516 = vmatprep.subr.bf16.mxu0 0
      %517 = vmatpush2.bf16.xpose.msra.mxu0 0
      %518 = vmatprep.subr.bf16.mxu0 0
      %519 = vmatpush2.bf16.xpose.msra.mxu0 0
      %520 = vmatprep.subr.bf16.mxu0 0
      %521 = vmatpush2.bf16.xpose.msra.mxu0 0
      %522 = vmatprep.subr.bf16.mxu0 0
      %523 = vmatpush2.bf16.xpose.msra.mxu0 0
      %524 = vmatprep.subr.bf16.mxu0 0
      %525 = vmatpush2.bf16.xpose.msra.mxu0 0
      %526 = vmatprep.subr.bf16.mxu0 0
      %527 = vmatpush2.bf16.xpose.msra.mxu0 0
      %528 = vmatprep.subr.bf16.mxu0 0
      %529 = vmatpush2.bf16.xpose.msra.mxu0 0
      %530 = vmatprep.mubr.bf16.mxu0 0
      %531 = vmatmul.mubr.bf16.gmra.mxu0 %v493
      %v532 = vpop.f32.mrf.mxu0
      %v533 = vadd.f32 0.0, %v532
      %v534 = vpop.f32.mrf.mxu0
      %v535 = vpop.f32.mrf.mxu0
      %v536 = vpop.f32.mrf.mxu0
      %537 = vdwg.mxu0
      %v538 = vsel %vm399, -1e+09, %v533
      %v539 = vld [vmem:[#allocation3] sm:$0xff]
      %v540 = vsel %vm350, %v538, -inf
      %541 = vmax.xlane.f32.xlu0 %v540
      %v542 = vpop.xlane.xlu0 %541
      %v543 = vmax.f32 %v539, %v542
      %v544 = vsub.f32 %v539, %v543
      %v545 = vmul.f32 %v544, 1.442695
      %v546 = vpow.pop %v545
      %548 = vset.pattern.permute.xlu0 1
      %549 = vperm.xlu0 %548, %v543
      %v550 = vpop.permute.xlu0 %549
      %v552 = vsub.f32 %v538, %v550
      %v553 = vmul.f32 %v552, 1.442695
      %v554 = vpow.pop %v553
      %v555 = vld [vmem:[#allocation4] sm:$0xff]
      %v556 = vmul.f32 %v546, %v555
      %v557 = vsel %vm350, %v554, 0.0
      %558 = vadd.xlane.f32.xlu0 %v557
      %v559 = vpop.xlane.xlu0 %558
      %v560 = vadd.f32 %v556, %v559
      %vm561 = vcmask 15368
      %562 = vst.msk [vmem:[#allocation4] sm:$0xff] %vm561, %v560
      %v563 = vpack.c.bf16 %v554, %v554
      %565 = vrot.lane.b32.xlu0 %v346, 120
      %v566 = vpop.permute.xlu0 %565
      %v568 = vsel %vm350, %v563, 0
      %v571 = vsel %vm429, %v566, 0
      %573 = vmatprep.subr.bf16.mxu0 0
      %574 = vmatpush1.bf16.msra.mxu0 0
      %575 = vmatprep.subr.bf16.mxu0 0
      %576 = vmatpush1.bf16.msra.mxu0 0
      %577 = vmatprep.subr.bf16.mxu0 0
      %578 = vmatpush1.bf16.msra.mxu0 0
      %579 = vmatprep.subr.bf16.mxu0 0
      %580 = vmatpush1.bf16.msra.mxu0 0
      %581 = vmatprep.subr.bf16.mxu0 0
      %582 = vmatpush1.bf16.msra.mxu0 0
      %583 = vmatprep.subr.bf16.mxu0 0
      %584 = vmatpush1.bf16.msra.mxu0 0
      %585 = vmatprep.subr.bf16.mxu0 0
      %586 = vmatpush1.bf16.msra.mxu0 0
      %587 = vmatprep.subr.bf16.mxu0 0
      %588 = vmatpush1.bf16.msra.mxu0 %v571
      %589 = vmatprep.subr.bf16.mxu0 0
      %590 = vmatpush2.bf16.msra.mxu0 0
      %591 = vmatprep.subr.bf16.mxu0 0
      %592 = vmatpush2.bf16.msra.mxu0 0
      %593 = vmatprep.subr.bf16.mxu0 0
      %594 = vmatpush2.bf16.msra.mxu0 0
      %595 = vmatprep.subr.bf16.mxu0 0
      %596 = vmatpush2.bf16.msra.mxu0 0
      %597 = vmatprep.subr.bf16.mxu0 0
      %598 = vmatpush2.bf16.msra.mxu0 0
      %599 = vmatprep.subr.bf16.mxu0 0
      %600 = vmatpush2.bf16.msra.mxu0 0
      %601 = vmatprep.subr.bf16.mxu0 0
      %602 = vmatpush2.bf16.msra.mxu0 0
      %603 = vmatprep.subr.bf16.mxu0 0
      %604 = vmatpush2.bf16.msra.mxu0 0
      %605 = vmatprep.mubr.bf16.mxu0 0
      %606 = vmatmul.mubr.bf16.gmra.mxu0 %v568
      %v607 = vpop.f32.mrf.mxu0
      %v608 = vadd.f32 0.0, %v607
      %v609 = vpop.f32.mrf.mxu0
      %v610 = vpop.f32.mrf.mxu0
      %v611 = vpop.f32.mrf.mxu0
      %612 = vdwg.mxu0
      %v613 = vld [vmem:[#allocation5] sm:$0xff]
      %615 = vset.pattern.permute.xlu0 1
      %616 = vperm.xlu0 %615, %v546
      %v617 = vpop.permute.xlu0 %616
      %v619 = vmul.f32 %v617, %v613
      %621 = vrot.lane.b32.xlu0 %v608, 8
      %v622 = vpop.permute.xlu0 %621
      %v624 = vadd.f32 %v619, %v622
      %vm625 = vcmask 130112
      %626 = vst.msk [vmem:[#allocation5] sm:$0xff] %vm625, %v624
      %627 = vst.msk [vmem:[#allocation3] sm:$0xff] %vm561, %v543
      %v628 = vld [vmem:[#allocation2] sm:$0xf]
      %v630 = vunpack.c.l.b16 %v628
      %v631 = vpack.c.b16 %v630, %v630
      %632 = vrot.lane.b32.xlu0 %v631, 112
      %v633 = vpop.permute.xlu0 %632
      %634 = vrot.lane.b32.xlu0 %v344, 112
      %v635 = vpop.permute.xlu0 %634
      %v637 = vsel %vm350, %v633, 0
      %v640 = vsel %vm350, %v635, 0
      %642 = vmatprep.subr.bf16.mxu0 0
      %643 = vmatpush1.bf16.xpose.msra.mxu0 0
      %644 = vmatprep.subr.bf16.mxu0 0
      %645 = vmatpush1.bf16.xpose.msra.mxu0 0
      %646 = vmatprep.subr.bf16.mxu0 0
      %647 = vmatpush1.bf16.xpose.msra.mxu0 0
      %648 = vmatprep.subr.bf16.mxu0 0
      %649 = vmatpush1.bf16.xpose.msra.mxu0 0
      %650 = vmatprep.subr.bf16.mxu0 0
      %651 = vmatpush1.bf16.xpose.msra.mxu0 0
      %652 = vmatprep.subr.bf16.mxu0 0
      %653 = vmatpush1.bf16.xpose.msra.mxu0 0
      %654 = vmatprep.subr.bf16.mxu0 0
      %655 = vmatpush1.bf16.xpose.msra.mxu0 0
      %656 = vmatprep.subr.bf16.mxu0 0
      %657 = vmatpush1.bf16.xpose.msra.mxu0 %v640
      %658 = vmatprep.subr.bf16.mxu0 0
      %659 = vmatpush2.bf16.xpose.msra.mxu0 0
      %660 = vmatprep.subr.bf16.mxu0 0
      %661 = vmatpush2.bf16.xpose.msra.mxu0 0
      %662 = vmatprep.subr.bf16.mxu0 0
      %663 = vmatpush2.bf16.xpose.msra.mxu0 0
      %664 = vmatprep.subr.bf16.mxu0 0
      %665 = vmatpush2.bf16.xpose.msra.mxu0 0
      %666 = vmatprep.subr.bf16.mxu0 0
      %667 = vmatpush2.bf16.xpose.msra.mxu0 0
      %668 = vmatprep.subr.bf16.mxu0 0
      %669 = vmatpush2.bf16.xpose.msra.mxu0 0
      %670 = vmatprep.subr.bf16.mxu0 0
      %671 = vmatpush2.bf16.xpose.msra.mxu0 0
      %672 = vmatprep.subr.bf16.mxu0 0
      %673 = vmatpush2.bf16.xpose.msra.mxu0 0
      %674 = vmatprep.mubr.bf16.mxu0 0
      %675 = vmatmul.mubr.bf16.gmra.mxu0 %v637
      %v676 = vpop.f32.mrf.mxu0
      %v677 = vadd.f32 0.0, %v676
      %v678 = vpop.f32.mrf.mxu0
      %v679 = vpop.f32.mrf.mxu0
      %v680 = vpop.f32.mrf.mxu0
      %681 = vdwg.mxu0
      %v682 = vsel %vm399, -1e+09, %v677
      %v683 = vld [vmem:[#allocation3] sm:$0xff]
      %v684 = vsel %vm350, %v682, -inf
      %685 = vmax.xlane.f32.xlu0 %v684
      %v686 = vpop.xlane.xlu0 %685
      %v687 = vmax.f32 %v683, %v686
      %v688 = vsub.f32 %v683, %v687
      %v689 = vmul.f32 %v688, 1.442695
      %v690 = vpow.pop %v689
      %692 = vset.pattern.permute.xlu0 2
      %693 = vperm.xlu0 %692, %v687
      %v694 = vpop.permute.xlu0 %693
      %v696 = vsub.f32 %v682, %v694
      %v697 = vmul.f32 %v696, 1.442695
      %v698 = vpow.pop %v697
      %v699 = vld [vmem:[#allocation4] sm:$0xff]
      %v700 = vmul.f32 %v690, %v699
      %v701 = vsel %vm350, %v698, 0.0
      %702 = vadd.xlane.f32.xlu0 %v701
      %v703 = vpop.xlane.xlu0 %702
      %v704 = vadd.f32 %v700, %v703
      %vm705 = vcmask 23568
      %706 = vst.msk [vmem:[#allocation4] sm:$0xff] %vm705, %v704
      %v707 = vpack.c.bf16 %v698, %v698
      %708 = vrot.lane.b32.xlu0 %v346, 112
      %v709 = vpop.permute.xlu0 %708
      %v711 = vsel %vm350, %v707, 0
      %v714 = vsel %vm429, %v709, 0
      %716 = vmatprep.subr.bf16.mxu0 0
      %717 = vmatpush1.bf16.msra.mxu0 0
      %718 = vmatprep.subr.bf16.mxu0 0
      %719 = vmatpush1.bf16.msra.mxu0 0
      %720 = vmatprep.subr.bf16.mxu0 0
      %721 = vmatpush1.bf16.msra.mxu0 0
      %722 = vmatprep.subr.bf16.mxu0 0
      %723 = vmatpush1.bf16.msra.mxu0 0
      %724 = vmatprep.subr.bf16.mxu0 0
      %725 = vmatpush1.bf16.msra.mxu0 0
      %726 = vmatprep.subr.bf16.mxu0 0
      %727 = vmatpush1.bf16.msra.mxu0 0
      %728 = vmatprep.subr.bf16.mxu0 0
      %729 = vmatpush1.bf16.msra.mxu0 0
      %730 = vmatprep.subr.bf16.mxu0 0
      %731 = vmatpush1.bf16.msra.mxu0 %v714
      %732 = vmatprep.subr.bf16.mxu0 0
      %733 = vmatpush2.bf16.msra.mxu0 0
      %734 = vmatprep.subr.bf16.mxu0 0
      %735 = vmatpush2.bf16.msra.mxu0 0
      %736 = vmatprep.subr.bf16.mxu0 0
      %737 = vmatpush2.bf16.msra.mxu0 0
      %738 = vmatprep.subr.bf16.mxu0 0
      %739 = vmatpush2.bf16.msra.mxu0 0
      %740 = vmatprep.subr.bf16.mxu0 0
      %741 = vmatpush2.bf16.msra.mxu0 0
      %742 = vmatprep.subr.bf16.mxu0 0
      %743 = vmatpush2.bf16.msra.mxu0 0
      %744 = vmatprep.subr.bf16.mxu0 0
      %745 = vmatpush2.bf16.msra.mxu0 0
      %746 = vmatprep.subr.bf16.mxu0 0
      %747 = vmatpush2.bf16.msra.mxu0 0
      %748 = vmatprep.mubr.bf16.mxu0 0
      %749 = vmatmul.mubr.bf16.gmra.mxu0 %v711
      %v750 = vpop.f32.mrf.mxu0
      %v751 = vadd.f32 0.0, %v750
      %v752 = vpop.f32.mrf.mxu0
      %v753 = vpop.f32.mrf.mxu0
      %v754 = vpop.f32.mrf.mxu0
      %755 = vdwg.mxu0
      %v756 = vld [vmem:[#allocation5] sm:$0xff]
      %758 = vset.pattern.permute.xlu0 2
      %759 = vperm.xlu0 %758, %v690
      %v760 = vpop.permute.xlu0 %759
      %v762 = vmul.f32 %v760, %v756
      %764 = vrot.lane.b32.xlu0 %v751, 16
      %v765 = vpop.permute.xlu0 %764
      %v767 = vadd.f32 %v762, %v765
      %vm768 = vcmask 195712
      %769 = vst.msk [vmem:[#allocation5] sm:$0xff] %vm768, %v767
      %770 = vst.msk [vmem:[#allocation3] sm:$0xff] %vm705, %v687
      %v771 = vld [vmem:[#allocation2] sm:$0xf]
      %v773 = vunpack.c.l.b16 %v771
      %v774 = vpack.c.b16 %v773, %v773
      %775 = vrot.lane.b32.xlu0 %v774, 104
      %v776 = vpop.permute.xlu0 %775
      %777 = vrot.lane.b32.xlu0 %v344, 104
      %v778 = vpop.permute.xlu0 %777
      %v780 = vsel %vm350, %v776, 0
      %v783 = vsel %vm350, %v778, 0
      %785 = vmatprep.subr.bf16.mxu0 0
      %786 = vmatpush1.bf16.xpose.msra.mxu0 0
      %787 = vmatprep.subr.bf16.mxu0 0
      %788 = vmatpush1.bf16.xpose.msra.mxu0 0
      %789 = vmatprep.subr.bf16.mxu0 0
      %790 = vmatpush1.bf16.xpose.msra.mxu0 0
      %791 = vmatprep.subr.bf16.mxu0 0
      %792 = vmatpush1.bf16.xpose.msra.mxu0 0
      %793 = vmatprep.subr.bf16.mxu0 0
      %794 = vmatpush1.bf16.xpose.msra.mxu0 0
      %795 = vmatprep.subr.bf16.mxu0 0
      %796 = vmatpush1.bf16.xpose.msra.mxu0 0
      %797 = vmatprep.subr.bf16.mxu0 0
      %798 = vmatpush1.bf16.xpose.msra.mxu0 0
      %799 = vmatprep.subr.bf16.mxu0 0
      %800 = vmatpush1.bf16.xpose.msra.mxu0 %v783
      %801 = vmatprep.subr.bf16.mxu0 0
      %802 = vmatpush2.bf16.xpose.msra.mxu0 0
      %803 = vmatprep.subr.bf16.mxu0 0
      %804 = vmatpush2.bf16.xpose.msra.mxu0 0
      %805 = vmatprep.subr.bf16.mxu0 0
      %806 = vmatpush2.bf16.xpose.msra.mxu0 0
      %807 = vmatprep.subr.bf16.mxu0 0
      %808 = vmatpush2.bf16.xpose.msra.mxu0 0
      %809 = vmatprep.subr.bf16.mxu0 0
      %810 = vmatpush2.bf16.xpose.msra.mxu0 0
      %811 = vmatprep.subr.bf16.mxu0 0
      %812 = vmatpush2.bf16.xpose.msra.mxu0 0
      %813 = vmatprep.subr.bf16.mxu0 0
      %814 = vmatpush2.bf16.xpose.msra.mxu0 0
      %815 = vmatprep.subr.bf16.mxu0 0
      %816 = vmatpush2.bf16.xpose.msra.mxu0 0
      %817 = vmatprep.mubr.bf16.mxu0 0
      %818 = vmatmul.mubr.bf16.gmra.mxu0 %v780
      %v819 = vpop.f32.mrf.mxu0
      %v820 = vadd.f32 0.0, %v819
      %v821 = vpop.f32.mrf.mxu0
      %v822 = vpop.f32.mrf.mxu0
      %v823 = vpop.f32.mrf.mxu0
      %824 = vdwg.mxu0
      %v825 = vsel %vm399, -1e+09, %v820
      %v826 = vld [vmem:[#allocation3] sm:$0xff]
      %v827 = vsel %vm350, %v825, -inf
      %828 = vmax.xlane.f32.xlu0 %v827
      %v829 = vpop.xlane.xlu0 %828
      %v830 = vmax.f32 %v826, %v829
      %v831 = vsub.f32 %v826, %v830
      %v832 = vmul.f32 %v831, 1.442695
      %v833 = vpow.pop %v832
      %835 = vset.pattern.permute.xlu0 3
      %836 = vperm.xlu0 %835, %v830
      %v837 = vpop.permute.xlu0 %836
      %v839 = vsub.f32 %v825, %v837
      %v840 = vmul.f32 %v839, 1.442695
      %v841 = vpow.pop %v840
      %v842 = vld [vmem:[#allocation4] sm:$0xff]
      %v843 = vmul.f32 %v833, %v842
      %v844 = vsel %vm350, %v841, 0.0
      %845 = vadd.xlane.f32.xlu0 %v844
      %v846 = vpop.xlane.xlu0 %845
      %v847 = vadd.f32 %v843, %v846
      %vm848 = vcmask 31768
      %849 = vst.msk [vmem:[#allocation4] sm:$0xff] %vm848, %v847
      %v850 = vpack.c.bf16 %v841, %v841
      %851 = vrot.lane.b32.xlu0 %v346, 104
      %v852 = vpop.permute.xlu0 %851
      %v854 = vsel %vm350, %v850, 0
      %v857 = vsel %vm429, %v852, 0
      %859 = vmatprep.subr.bf16.mxu0 0
      %860 = vmatpush1.bf16.msra.mxu0 0
      %861 = vmatprep.subr.bf16.mxu0 0
      %862 = vmatpush1.bf16.msra.mxu0 0
      %863 = vmatprep.subr.bf16.mxu0 0
      %864 = vmatpush1.bf16.msra.mxu0 0
      %865 = vmatprep.subr.bf16.mxu0 0
      %866 = vmatpush1.bf16.msra.mxu0 0
      %867 = vmatprep.subr.bf16.mxu0 0
      %868 = vmatpush1.bf16.msra.mxu0 0
      %869 = vmatprep.subr.bf16.mxu0 0
      %870 = vmatpush1.bf16.msra.mxu0 0
      %871 = vmatprep.subr.bf16.mxu0 0
      %872 = vmatpush1.bf16.msra.mxu0 0
      %873 = vmatprep.subr.bf16.mxu0 0
      %874 = vmatpush1.bf16.msra.mxu0 %v857
      %875 = vmatprep.subr.bf16.mxu0 0
      %876 = vmatpush2.bf16.msra.mxu0 0
      %877 = vmatprep.subr.bf16.mxu0 0
      %878 = vmatpush2.bf16.msra.mxu0 0
      %879 = vmatprep.subr.bf16.mxu0 0
      %880 = vmatpush2.bf16.msra.mxu0 0
      %881 = vmatprep.subr.bf16.mxu0 0
      %882 = vmatpush2.bf16.msra.mxu0 0
      %883 = vmatprep.subr.bf16.mxu0 0
      %884 = vmatpush2.bf16.msra.mxu0 0
      %885 = vmatprep.subr.bf16.mxu0 0
      %886 = vmatpush2.bf16.msra.mxu0 0
      %887 = vmatprep.subr.bf16.mxu0 0
      %888 = vmatpush2.bf16.msra.mxu0 0
      %889 = vmatprep.subr.bf16.mxu0 0
      %890 = vmatpush2.bf16.msra.mxu0 0
      %891 = vmatprep.mubr.bf16.mxu0 0
      %892 = vmatmul.mubr.bf16.gmra.mxu0 %v854
      %v893 = vpop.f32.mrf.mxu0
      %v894 = vadd.f32 0.0, %v893
      %v895 = vpop.f32.mrf.mxu0
      %v896 = vpop.f32.mrf.mxu0
      %v897 = vpop.f32.mrf.mxu0
      %898 = vdwg.mxu0
      %v899 = vld [vmem:[#allocation5] sm:$0xff]
      %901 = vset.pattern.permute.xlu0 3
      %902 = vperm.xlu0 %901, %v833
      %v903 = vpop.permute.xlu0 %902
      %v905 = vmul.f32 %v903, %v899
      %907 = vrot.lane.b32.xlu0 %v894, 24
      %v908 = vpop.permute.xlu0 %907
      %v910 = vadd.f32 %v905, %v908
      %vm911 = vcmask 261312
      %912 = vst.msk [vmem:[#allocation5] sm:$0xff] %vm911, %v910
      %913 = vst.msk [vmem:[#allocation3] sm:$0xff] %vm848, %v830
      // Predicated region
      $region41: #{multi_head_attention.4} parent=35 // pred_check
        %p914 = pneg %p329
      $region42: #{multi_head_attention.4} parent=35 // pred_check_branch
        %916 = sbr.rel (%p914) target = $region44
      $region43: #{multi_head_attention.4} parent=35 // pred_region
        %v917 = vld [vmem:[#allocation4] sm:$0xff]
        %v918 = vrcp.pop %v917
        %v919 = vld [vmem:[#allocation5] sm:$0xff]
        %921 = vset.pattern.permute.xlu0 0
        %922 = vperm.xlu0 %921, %v918
        %v923 = vpop.permute.xlu0 %922
        %v925 = vmul.f32 %v919, %v923
        %926 = vset.pattern.permute.xlu0 1
        %927 = vperm.xlu0 %926, %v918
        %v928 = vpop.permute.xlu0 %927
        %v930 = vmul.f32 %v919, %v928
        %931 = vset.pattern.permute.xlu0 2
        %932 = vperm.xlu0 %931, %v918
        %v933 = vpop.permute.xlu0 %932
        %v935 = vmul.f32 %v919, %v933
        %936 = vset.pattern.permute.xlu0 3
        %937 = vperm.xlu0 %936, %v918
        %v938 = vpop.permute.xlu0 %937
        %v940 = vmul.f32 %v919, %v938
        %v941 = vsel %vm350, %v925, %v930
        %vm942 = vcmask 130048
        %v943 = vsel %vm942, %v941, %v935
        %vm944 = vcmask 195584
        %v945 = vsel %vm944, %v943, %v940
        %vm946 = vcmask 261120
        %947 = vst.msk [vmem:[%s325] sm:$0xff] %vm946, %v945
      $region44: #{multi_head_attention.4} parent=35 // pred_fallthru
        _
      %p948 = scmp.lt.s32.totalorder %s20, 1
      %s949 = scalar_select %p948, %s20, 1
      %p950 = scmp.lt.s32.totalorder %s21, 0
      %s951 = scalar_select %p950, %s21, 0
      %s952 = sadd.s32 %s951, %s949
      %s953 = smul.addr %s952, 8
      %s954 = scalar_lea.vmem %s4, %s953
      // Predicated region
      $region45: #{multi_head_attention.4} parent=35 // pred_check
        %p955 = pneg %p168
      $region46: #{multi_head_attention.4} parent=35 // pred_check_branch
        %957 = sbr.rel (%p955) target = $region48
      $region47: #{multi_head_attention.4} parent=35 // pred_region
        _
      $region48: #{multi_head_attention.4} parent=35 // pred_fallthru
        _
    $region36: #{multi_head_attention.4} parent=5 // pred_fallthru
      _
    %p958 = scmp.le.s32.totalorder 2, %s10
    // Predicated region
    $region49: #{multi_head_attention.4} parent=5 // pred_check
      %p959 = pneg %p958
    $region50: #{multi_head_attention.4} parent=5 // pred_check_branch
      %961 = sbr.rel (%p959) target = $region52
    $region51: #{multi_head_attention.4} parent=5 // pred_region
      %s962 = ssub.s32 %s10, 2
      // Predicated region
      $region53: #{multi_head_attention.4} parent=51 // pred_check
        %p963 = pneg %p174
      $region54: #{multi_head_attention.4} parent=51 // pred_check_branch
        %965 = sbr.rel (%p963) target = $region56
      $region55: #{multi_head_attention.4} parent=51 // pred_region
        %p966 = scmp.lt.s32.totalorder %s23, 1
        %s967 = scalar_select %p966, %s23, 1
        %p968 = scmp.lt.s32.totalorder %s24, 0
        %s969 = scalar_select %p968, %s24, 0
        %s970 = sadd.s32 %s969, %s967
        %s971 = smul.addr %s970, 8
        %s972 = scalar_lea.vmem %s4, %s971
      $region56: #{multi_head_attention.4} parent=51 // pred_fallthru
        _
    $region52: #{multi_head_attention.4} parent=5 // pred_fallthru
      _
  $region6: #{multi_head_attention.4} parent=0 // loop_footer
    %s14 = sadd.s32 1, %s10
  $region7: #{multi_head_attention.4} parent=0 // loop_footer_branch
    %9 = sbr.rel target = $region3
  $region8: #{multi_head_attention.4} parent=0 // loop_exit
    _

</llo_original>
